<compile_context>
chip_gen: v7x
topology: tpu7x:2x2x1
jax: 0.10.0
libtpu: 0.0.40
codegen_flags: <defaults>
</compile_context>

<pallas_src>
import jax
import jax.numpy as jnp
import numpy as np
from jax.experimental import pallas as pl
from jax.experimental.pallas import tpu as pltpu

EPS = 1e-5
LANE = 128

_VMEM_LIMIT_CACHE = None


def _vmem_limit_bytes():
    """Generation-aware scoped-VMEM limit: ~3/4 of physical, capped at 96 MiB."""
    global _VMEM_LIMIT_CACHE
    if _VMEM_LIMIT_CACHE is None:
        cap = None
        try:
            info = pltpu.get_tpu_info()
            for name in ("vmem_capacity_bytes", "vmem_size_bytes", "vmem_bytes"):
                v = getattr(info, name, None)
                if v:
                    cap = int(v)
                    break
        except Exception:
            cap = None
        if cap is None:
            _VMEM_LIMIT_CACHE = 48 * 1024 * 1024      # safe on every generation
        else:
            _VMEM_LIMIT_CACHE = int(min(cap * 3 // 4, 96 * 1024 * 1024))
    return _VMEM_LIMIT_CACHE


def _round_up(x, m):
    return (x + m - 1) // m * m


def _tile_and_pad_rows(m, preferred=1024):
    """Pick a row tile; if M is ragged, pad M up to a tile multiple (zero rows)."""
    for t in (preferred, 512, 256, 128):
        if t <= preferred and m % t == 0:
            return t, m
    t = min(preferred, 256)
    return t, _round_up(m, t)


def _pick_dt(d):
    for dt in (4, 2, 1):
        if d % dt == 0:
            return dt
    return 1


# ---------------------------------------------------------------------------
# Kernel 1: 1x1x1 conv as (tm, K)@(K, C) matmul + per-tile BN partial stats.
# Padded (zero) rows contribute 0 to both partial sums, so stats stay exact.
# ---------------------------------------------------------------------------
def _mm_stats_kernel(x_ref, w_ref, y_ref, ps_ref, pq_ref):
    acc = jnp.dot(x_ref[...], w_ref[...], preferred_element_type=jnp.float32)
    y_ref[...] = acc.astype(y_ref.dtype)
    ps_ref[0] = jnp.sum(acc, axis=0, keepdims=True)
    pq_ref[0] = jnp.sum(acc * acc, axis=0, keepdims=True)


def _make_bnrelu_mm_stats_kernel(tm, m_true, need_mask):
    """Same, with the previous stage's BN+ReLU fused into the input read."""
    def kernel(x_ref, sc_ref, sh_ref, w_ref, y_ref, ps_ref, pq_ref):
        a = jnp.maximum(x_ref[...].astype(jnp.float32) * sc_ref[...] + sh_ref[...], 0.0)
        if need_mask:
            # zero padded rows so they don't contaminate the BN partial sums
            row = (pl.program_id(0) * tm
                   + jax.lax.broadcasted_iota(jnp.int32, (tm, 1), 0))
            a = jnp.where(row < m_true, a, 0.0)
        acc = jnp.dot(a.astype(jnp.bfloat16), w_ref[...],
                      preferred_element_type=jnp.float32)
        y_ref[...] = acc.astype(y_ref.dtype)
        ps_ref[0] = jnp.sum(acc, axis=0, keepdims=True)
        pq_ref[0] = jnp.sum(acc * acc, axis=0, keepdims=True)
    return kernel


def conv1x1_stats(x2d, w, *, fuse_bn=False, scale=None, shift=None, preferred_tm=1024):
    # TODO(synk): K-axis tiling (third "arbitrary" grid axis + f32 accumulator) for
    #             production channel counts where the full (K, C) weight block is large.
    M, K = x2d.shape
    _, C = w.shape
    tm, Mp = _tile_and_pad_rows(M, preferred_tm)
    if Mp != M:
        x2d = jnp.pad(x2d, ((0, Mp - M), (0, 0)))
    g = Mp // tm
    cost = pl.CostEstimate(
        flops=2 * Mp * K * C, transcendentals=0,
        bytes_accessed=(Mp * K + K * C + Mp * C) * 2 + 2 * g * C * 4)
    out_shape = (jax.ShapeDtypeStruct((Mp, C), jnp.bfloat16),
                 jax.ShapeDtypeStruct((g, 1, C), jnp.float32),
                 jax.ShapeDtypeStruct((g, 1, C), jnp.float32))
    out_specs = [pl.BlockSpec((tm, C), lambda i: (i, 0)),
                 pl.BlockSpec((1, 1, C), lambda i: (i, 0, 0)),
                 pl.BlockSpec((1, 1, C), lambda i: (i, 0, 0))]
    if fuse_bn:
        kern = _make_bnrelu_mm_stats_kernel(tm, M, Mp != M)
        in_specs = [pl.BlockSpec((tm, K), lambda i: (i, 0)),
                    pl.BlockSpec((1, K), lambda i: (0, 0)),
                    pl.BlockSpec((1, K), lambda i: (0, 0)),
                    pl.BlockSpec((K, C), lambda i: (0, 0))]
        args = (x2d, scale, shift, w)
    else:
        kern = _mm_stats_kernel
        in_specs = [pl.BlockSpec((tm, K), lambda i: (i, 0)),
                    pl.BlockSpec((K, C), lambda i: (0, 0))]
        args = (x2d, w)
    y, ps, pq = pl.pallas_call(
        kern,
        out_shape=out_shape,
        grid_spec=pltpu.PrefetchScalarGridSpec(
            num_scalar_prefetch=0, grid=(g,),
            in_specs=in_specs, out_specs=out_specs),
        compiler_params=pltpu.CompilerParams(
            dimension_semantics=("parallel",),
            vmem_limit_bytes=_vmem_limit_bytes()),
        cost_estimate=cost,
    )(*args)
    if Mp != M:
        y = y[:M]
    return y, ps, pq


# ---------------------------------------------------------------------------
# Kernel 2: 3x3x3 conv (pad=1, stride=1), BN1+ReLU fused into the input read.
# Grid = (N, D//dt). Per step: dt+2 halo'd depth planes are fetched (each once),
# BN+ReLU'd + halo-masked once into a bf16 VMEM ring, then for each (kd, kh) a
# (dt*H*W, 3*CP) slab is assembled and matmul'd against pre-packed
# (9, 3*CP, COUTP) weights. Also emits per-step BN partial stats.
# ---------------------------------------------------------------------------
def _make_conv3x3x3_kernel(D, H, W, CP, COUTP, dt):
    Hp, Wp = H + 2, W + 2
    Mstep = dt * H * W

    def kernel(*refs):
        plane_refs = refs[:dt + 2]
        w_ref, sc_ref, sh_ref = refs[dt + 2:dt + 5]
        y_ref, ps_ref, pq_ref = refs[dt + 5:dt + 8]
        act_ref, slab_ref = refs[dt + 8], refs[dt + 9]

        db = pl.program_id(1)

        # H/W halo mask generated in-kernel (no HBM mask array).
        hh = jax.lax.broadcasted_iota(jnp.int32, (Hp, Wp, 1), 0)
        ww = jax.lax.broadcasted_iota(jnp.int32, (Hp, Wp, 1), 1)
        mhw = ((hh >= 1) & (hh <= H) & (ww >= 1) & (ww <= W)).astype(jnp.float32)

        sc = sc_ref[...]
        sh = sh_ref[...]

        # BN1 + ReLU each incoming plane exactly once; depth halo zeroed via `dvalid`,
        # H/W halo via `mhw`, so padding behaves like zero padding *after* BN+ReLU.
        for j in range(dt + 2):
            a = jnp.maximum(plane_refs[j][...].astype(jnp.float32) * sc + sh, 0.0)
            g = db * dt + j                     # index into the depth-padded array
            dvalid = jnp.logical_and(g >= 1, g <= D).astype(jnp.float32)
            act_ref[j] = (a * (mhw * dvalid)).astype(jnp.bfloat16)

        # 9 matmuls with K = 3*CP (kw taps fused into K) -- no im2col in HBM.
        acc = jnp.zeros((Mstep, COUTP), jnp.float32)
        for kd in range(3):
            for kh in range(3):
                for kw in range(3):
                    win = act_ref[kd:kd + dt, kh:kh + H, kw:kw + W, :]
                    slab_ref[:, kw * CP:(kw + 1) * CP] = win.reshape(Mstep, CP)
                acc = acc + jnp.dot(slab_ref[...], w_ref[kd * 3 + kh],
                                    preferred_element_type=jnp.float32)

        y_ref[0, 0] = acc.astype(y_ref.dtype)
        ps_ref[0] = jnp.sum(acc, axis=0, keepdims=True)
        pq_ref[0] = jnp.sum(acc * acc, axis=0, keepdims=True)

    return kernel


def conv3x3x3_stats(y1_pad, w2, scale1, shift1, N, D, H, W, dt):
    CP = y1_pad.shape[-1]
    COUTP = w2.shape[-1]
    Hp, Wp = H + 2, W + 2
    DB = D // dt
    Mstep = dt * H * W
    kern = _make_conv3x3x3_kernel(D, H, W, CP, COUTP, dt)

    # dt+2 single-plane taps -> each plane DMA'd once per step ((dt+2)/dt amplification).
    in_specs = [pl.BlockSpec((None, None, Hp, Wp, CP),
                             lambda n, db, j=j: (n, db * dt + j, 0, 0, 0))
                for j in range(dt + 2)]
    in_specs += [
        # TODO(synk): pipeline_mode=pl.Buffered(1) for the weights at production channel
        #             counts on v7x (64 MiB VMEM) to avoid double-buffering a large block.
        pl.BlockSpec((9, 3 * CP, COUTP), lambda n, db: (0, 0, 0)),
        pl.BlockSpec((1, 1, CP), lambda n, db: (0, 0, 0)),
        pl.BlockSpec((1, 1, CP), lambda n, db: (0, 0, 0)),
    ]
    out_specs = [
        pl.BlockSpec((1, 1, Mstep, COUTP), lambda n, db: (n, db, 0, 0)),
        pl.BlockSpec((1, 1, COUTP), lambda n, db: (n * DB + db, 0, 0)),
        pl.BlockSpec((1, 1, COUTP), lambda n, db: (n * DB + db, 0, 0)),
    ]
    out_shape = (jax.ShapeDtypeStruct((N, DB, Mstep, COUTP), jnp.bfloat16),
                 jax.ShapeDtypeStruct((N * DB, 1, COUTP), jnp.float32),
                 jax.ShapeDtypeStruct((N * DB, 1, COUTP), jnp.float32))
    cost = pl.CostEstimate(
        flops=2 * N * D * H * W * 27 * CP * COUTP, transcendentals=0,
        bytes_accessed=(N * DB * (dt + 2) * Hp * Wp * CP * 2
                        + 27 * CP * COUTP * 2
                        + N * D * H * W * COUTP * 2
                        + 2 * N * DB * COUTP * 4))
    return pl.pallas_call(
        kern,
        out_shape=out_shape,
        grid_spec=pltpu.PrefetchScalarGridSpec(
            num_scalar_prefetch=0, grid=(N, DB),
            in_specs=in_specs, out_specs=out_specs,
            scratch_shapes=[pltpu.VMEM((dt + 2, Hp, Wp, CP), jnp.bfloat16),
                            pltpu.VMEM((Mstep, 3 * CP), jnp.bfloat16)]),
        compiler_params=pltpu.CompilerParams(
            dimension_semantics=("parallel", "parallel"),
            vmem_limit_bytes=_vmem_limit_bytes()),
        cost_estimate=cost,
    )(*([y1_pad] * (dt + 2)), w2, scale1, shift1)


# ---------------------------------------------------------------------------
# Kernel 3: final BN3-apply + residual add + ReLU (only elementwise pass left).
# ---------------------------------------------------------------------------
def _bn_res_relu_kernel(y_ref, sc_ref, sh_ref, r_ref, o_ref):
    o = (y_ref[...].astype(jnp.float32) * sc_ref[...] + sh_ref[...]
         + r_ref[...].astype(jnp.float32))
    o_ref[...] = jnp.maximum(o, 0.0)


def bn_res_relu(y2d, scale, shift, res2d, preferred_tm=1024):
    M, C = y2d.shape
    tm, Mp = _tile_and_pad_rows(M, preferred_tm)
    if Mp != M:
        y2d = jnp.pad(y2d, ((0, Mp - M), (0, 0)))
        res2d = jnp.pad(res2d, ((0, Mp - M), (0, 0)))
    out = pl.pallas_call(
        _bn_res_relu_kernel,
        out_shape=jax.ShapeDtypeStruct((Mp, C), jnp.float32),
        grid_spec=pltpu.PrefetchScalarGridSpec(
            num_scalar_prefetch=0, grid=(Mp // tm,),
            in_specs=[pl.BlockSpec((tm, C), lambda i: (i, 0)),
                      pl.BlockSpec((1, C), lambda i: (0, 0)),
                      pl.BlockSpec((1, C), lambda i: (0, 0)),
                      pl.BlockSpec((tm, C), lambda i: (i, 0))],
            out_specs=pl.BlockSpec((tm, C), lambda i: (i, 0))),
        compiler_params=pltpu.CompilerParams(
            dimension_semantics=("parallel",),
            vmem_limit_bytes=_vmem_limit_bytes()),
    )(y2d, scale, shift, res2d)
    if Mp != M:
        out = out[:M]
    return out


# ---------------------------------------------------------------------------
# Glue: BN stat folding (training-mode, biased variance) and the forward pass.
# ---------------------------------------------------------------------------
def fold_bn(psum, psq, count, gamma_p, beta_p):
    # TODO(synk): shifted-mean / Welford partials for better cancellation at large means.
    s = jnp.sum(psum, axis=(0, 1))
    q = jnp.sum(psq, axis=(0, 1))
    mean = s / count
    var = jnp.maximum(q / count - mean * mean, 0.0)
    scale = gamma_p / jnp.sqrt(var + EPS)
    shift = beta_p - mean * scale
    return scale.astype(jnp.float32), shift.astype(jnp.float32)


def bottleneck_forward(x_ncdhw, params, stride=1):
    assert stride == 1, "stride != 1 needs the downsample branch (not implemented)"
    # TODO(synk): downsample branch (downsample is None in this config) / stride > 1.

    w1, w2, w3 = params["w1"], params["w2"], params["w3"]
    CIN_P, CMID_P = w1.shape
    COUT_P = w3.shape[1]

    x = jnp.transpose(x_ncdhw, (0, 2, 3, 4, 1))            # NCDHW -> NDHWC
    N, D, H, W, Cin = x.shape
    assert Cin == params["cout"], "downsample=None requires inplanes == planes*4"
    M = N * D * H * W

    # channel-pad to 128 lanes; padded channels stay exactly 0 through all stages.
    x = jnp.pad(x, ((0, 0),) * 4 + ((0, CIN_P - Cin),)).astype(jnp.bfloat16)
    x2d = x.reshape(M, CIN_P)

    # --- stage 1: conv1 (1x1x1) -> raw output + BN1 batch stats (BN1/ReLU applied
    #     lazily inside stage 2's input read) ---
    y1, ps1, pq1 = conv1x1_stats(x2d, w1)
    sc1, sh1 = fold_bn(ps1, pq1, M, params["g1"], params["b1"])

    # --- stage 2: conv2 (3x3x3, pad=1) with BN1+ReLU fused into its input read ---
    dt = _pick_dt(D)
    y1_pad = jnp.pad(y1.reshape(N, D, H, W, CMID_P),
                     ((0, 0), (1, 1), (1, 1), (1, 1), (0, 0)))
    y2, ps2, pq2 = conv3x3x3_stats(
        y1_pad, w2, sc1.reshape(1, 1, -1), sh1.reshape(1, 1, -1), N, D, H, W, dt)
    sc2, sh2 = fold_bn(ps2, pq2, M, params["g2"], params["b2"])

    # --- stage 3: conv3 (1x1x1) with BN2+ReLU fused into its input read ---
    y3, ps3, pq3 = conv1x1_stats(y2.reshape(M, CMID_P), w3, fuse_bn=True,
                                 scale=sc2.reshape(1, -1), shift=sh2.reshape(1, -1))
    sc3, sh3 = fold_bn(ps3, pq3, M, params["g3"], params["b3"])

    # --- final: BN3 + residual + ReLU ---
    out = bn_res_relu(y3, sc3.reshape(1, -1), sh3.reshape(1, -1), x2d)
    out = out.reshape(N, D, H, W, COUT_P)[..., : params["cout"]]
    return jnp.transpose(out, (0, 4, 1, 2, 3))             # back to NCDHW


# ---------------------------------------------------------------------------
# Pure-JAX reference (lax.conv) for a correctness check.
# ---------------------------------------------------------------------------
def ref_bottleneck(x_ncdhw, w1_t, w2_t, w3_t, g1, b1, g2, b2, g3, b3, stride=1):
    x = jnp.transpose(x_ncdhw, (0, 2, 3, 4, 1))

    def conv(inp, wt, st, pad):
        w = jnp.transpose(wt, (2, 3, 4, 1, 0))              # (kd,kh,kw,Cin,Cout)
        return jax.lax.conv_general_dilated(
            inp, w, window_strides=(st,) * 3, padding=[(pad, pad)] * 3,
            dimension_numbers=("NDHWC", "DHWIO", "NDHWC"))

    def bn(y, g, b):
        mean = y.mean(axis=(0, 1, 2, 3), keepdims=True)
        var = ((y - mean) ** 2).mean(axis=(0, 1, 2, 3), keepdims=True)
        return (y - mean) / jnp.sqrt(var + EPS) * g + b

    out = jax.nn.relu(bn(conv(x, w1_t, 1, 0), g1, b1))
    out = jax.nn.relu(bn(conv(out, w2_t, stride, 1), g2, b2))
    out = bn(conv(out, w3_t, 1, 0), g3, b3)
    out = jax.nn.relu(out + x)
    return jnp.transpose(out, (0, 4, 1, 2, 3))


if __name__ == "__main__":
    key = jax.random.PRNGKey(0)
    kx, k1, k2, k3 = jax.random.split(key, 4)

    # Bottleneck(inplanes=16, planes=4), stride=1, downsample=None.
    N, D, H, W = 2, 8, 8, 8
    planes = 4
    inplanes = planes * 4                      # 16 -> residual add is valid
    stride = 1

    x = jax.random.normal(kx, (N, inplanes, D, H, W), jnp.float32)

    # PyTorch-layout conv weights (Cout, Cin, kd, kh, kw).
    w1_t = 0.1 * jax.random.normal(k1, (planes, inplanes, 1, 1, 1), jnp.float32)
    w2_t = 0.1 * jax.random.normal(k2, (planes, planes, 3, 3, 3), jnp.float32)
    w3_t = 0.1 * jax.random.normal(k3, (planes * 4, planes, 1, 1, 1), jnp.float32)

    # BatchNorm3d default init: weight=1, bias=0.
    g1 = jnp.ones((planes,), jnp.float32);      b1 = jnp.zeros((planes,), jnp.float32)
    g2 = jnp.ones((planes,), jnp.float32);      b2 = jnp.zeros((planes,), jnp.float32)
    g3 = jnp.ones((planes * 4,), jnp.float32);  b3 = jnp.zeros((planes * 4,), jnp.float32)

    # Lane-dense (128-padded) matmul-layout parameters; padded rows/cols/gammas are 0.
    CIN_P = _round_up(inplanes, LANE)
    CMID_P = _round_up(planes, LANE)
    COUT_P = _round_up(planes * 4, LANE)

    w1_p = jnp.zeros((CIN_P, CMID_P), jnp.float32).at[:inplanes, :planes].set(
        jnp.transpose(w1_t[:, :, 0, 0, 0], (1, 0)))
    # conv2 weights packed for K-fused taps: (kd*3+kh, kw*CP + cin, cout)
    w2_p = jnp.zeros((3, 3, 3, CMID_P, CMID_P), jnp.float32).at[
        :, :, :, :planes, :planes].set(jnp.transpose(w2_t, (2, 3, 4, 1, 0)))
    w2_p = w2_p.reshape(9, 3 * CMID_P, CMID_P)
    w3_p = jnp.zeros((CMID_P, COUT_P), jnp.float32).at[:planes, :planes * 4].set(
        jnp.transpose(w3_t[:, :, 0, 0, 0], (1, 0)))

    def _padvec(v, n):
        return jnp.zeros((n,), jnp.float32).at[: v.shape[0]].set(v)

    params = {
        "w1": w1_p.astype(jnp.bfloat16),
        "w2": w2_p.astype(jnp.bfloat16),
        "w3": w3_p.astype(jnp.bfloat16),
        "g1": _padvec(g1, CMID_P), "b1": _padvec(b1, CMID_P),
        "g2": _padvec(g2, CMID_P), "b2": _padvec(b2, CMID_P),
        "g3": _padvec(g3, COUT_P), "b3": _padvec(b3, COUT_P),
        "cout": planes * 4,
    }

    out = bottleneck_forward(x, params, stride=stride)
    out = jax.block_until_ready(out)

    ref = ref_bottleneck(x, w1_t, w2_t, w3_t, g1, b1, g2, b2, g3, b3, stride=stride)
    # tolerance reflects bf16 storage of activations/weights (f32 accumulation).
    np.testing.assert_allclose(np.asarray(out), np.asarray(ref), atol=5e-2, rtol=5e-2)

    print("KERNEL_OK")
</pallas_src>

<mosaic_0001>
module attributes {stable_mosaic.version = 11 : i64} {
  func.func @_mm_stats_kernel(%arg0: i32, %arg1: memref<1024x128xbf16, #tpu.memory_space<vmem>>, %arg2: memref<128x128xbf16, #tpu.memory_space<vmem>>, %arg3: memref<1024x128xbf16, #tpu.memory_space<vmem>>, %arg4: memref<1x1x128xf32, #tpu.memory_space<vmem>>, %arg5: memref<1x1x128xf32, #tpu.memory_space<vmem>>) attributes {dimension_semantics = [#tpu.dimension_semantics<parallel>], iteration_bounds = array<i64: 1>, scalar_prefetch = 0 : i64, scratch_operands = 0 : i64, tpu.core_type = #tpu.core_type<tc>, window_params = [{transform_indices = @transform_0, window_bounds = array<i64: 1024, 128>}, {pipeline_mode = #tpu.pipeline_mode<synchronous>, transform_indices = @transform_1, window_bounds = array<i64: 128, 128>}, {transform_indices = @transform_2, window_bounds = array<i64: 1024, 128>}, {transform_indices = @transform_3, window_bounds = array<i64: 1, 1, 128>}, {transform_indices = @transform_4, window_bounds = array<i64: 1, 1, 128>}]} {
    %c0 = arith.constant 0 : index
    %c0_0 = arith.constant 0 : index
    %0 = vector.load %arg1[%c0, %c0_0] : memref<1024x128xbf16, #tpu.memory_space<vmem>>, vector<1024x128xbf16>
    %c0_1 = arith.constant 0 : index
    %c0_2 = arith.constant 0 : index
    %1 = vector.load %arg2[%c0_1, %c0_2] : memref<128x128xbf16, #tpu.memory_space<vmem>>, vector<128x128xbf16>
    %cst = arith.constant dense<0.000000e+00> : vector<1024x128xf32>
    %2 = tpu.matmul %0, %1, %cst {dimension_numbers = #tpu.dot_dimension_numbers<[1], [0], [0], [1], [0, 0, 1, 1], [], []>} : vector<1024x128xbf16>, vector<128x128xbf16>, vector<1024x128xf32> -> vector<1024x128xf32>
    %3 = arith.truncf %2 : vector<1024x128xf32> to vector<1024x128xbf16>
    %c0_3 = arith.constant 0 : index
    %c0_4 = arith.constant 0 : index
    %4 = vector.load %arg3[%c0_3, %c0_4] : memref<1024x128xbf16, #tpu.memory_space<vmem>>, vector<1024x128xbf16>
    tpu.vector_store %arg3[%c0_3, %c0_4], %3 {strides = array<i32>} : memref<1024x128xbf16, #tpu.memory_space<vmem>>, vector<1024x128xbf16>,
    %cst_5 = arith.constant dense<0.000000e+00> : vector<128xf32>
    %5 = vector.multi_reduction <add>, %2, %cst_5 [0] : vector<1024x128xf32> to vector<128xf32>
    %6 = vector.shape_cast %5 : vector<128xf32> to vector<1x128xf32>
    %c0_6 = arith.constant 0 : index
    %c0_7 = arith.constant 0 : index
    %c0_8 = arith.constant 0 : index
    %7 = vector.load %arg4[%c0_6, %c0_7, %c0_8] : memref<1x1x128xf32, #tpu.memory_space<vmem>>, vector<1x1x128xf32>
    %8 = vector.shape_cast %7 : vector<1x1x128xf32> to vector<1x128xf32>
    %9 = vector.shape_cast %6 : vector<1x128xf32> to vector<1x1x128xf32>
    tpu.vector_store %arg4[%c0_6, %c0_7, %c0_8], %9 {strides = array<i32>} : memref<1x1x128xf32, #tpu.memory_space<vmem>>, vector<1x1x128xf32>,
    %10 = arith.mulf %2, %2 : vector<1024x128xf32>
    %cst_9 = arith.constant dense<0.000000e+00> : vector<128xf32>
    %11 = vector.multi_reduction <add>, %10, %cst_9 [0] : vector<1024x128xf32> to vector<128xf32>
    %12 = vector.shape_cast %11 : vector<128xf32> to vector<1x128xf32>
    %c0_10 = arith.constant 0 : index
    %c0_11 = arith.constant 0 : index
    %c0_12 = arith.constant 0 : index
    %13 = vector.load %arg5[%c0_10, %c0_11, %c0_12] : memref<1x1x128xf32, #tpu.memory_space<vmem>>, vector<1x1x128xf32>
    %14 = vector.shape_cast %13 : vector<1x1x128xf32> to vector<1x128xf32>
    %15 = vector.shape_cast %12 : vector<1x128xf32> to vector<1x1x128xf32>
    tpu.vector_store %arg5[%c0_10, %c0_11, %c0_12], %15 {strides = array<i32>} : memref<1x1x128xf32, #tpu.memory_space<vmem>>, vector<1x1x128xf32>,
    return
  }
  func.func @transform_0(%arg0: i32) -> (i32, i32) {
    %c0_i32 = arith.constant 0 : i32
    %c0_i32_0 = arith.constant 0 : i32
    return %arg0, %c0_i32 : i32, i32
  }
  func.func @transform_1(%arg0: i32) -> (i32, i32) {
    %c0_i32 = arith.constant 0 : i32
    %c0_i32_0 = arith.constant 0 : i32
    %c0_i32_1 = arith.constant 0 : i32
    return %c0_i32, %c0_i32_0 : i32, i32
  }
  func.func @transform_2(%arg0: i32) -> (i32, i32) {
    %c0_i32 = arith.constant 0 : i32
    %c0_i32_0 = arith.constant 0 : i32
    return %arg0, %c0_i32 : i32, i32
  }
  func.func @transform_3(%arg0: i32) -> (i32, i32, i32) {
    %c0_i32 = arith.constant 0 : i32
    %c0_i32_0 = arith.constant 0 : i32
    %c0_i32_1 = arith.constant 0 : i32
    return %arg0, %c0_i32, %c0_i32_0 : i32, i32, i32
  }
  func.func @transform_4(%arg0: i32) -> (i32, i32, i32) {
    %c0_i32 = arith.constant 0 : i32
    %c0_i32_0 = arith.constant 0 : i32
    %c0_i32_1 = arith.constant 0 : i32
    return %arg0, %c0_i32, %c0_i32_0 : i32, i32, i32
  }
}

</mosaic_0001>

<llo_original>
// kernel: tpu_custom_call.1
$region0: #{tpu_custom_call.1}
  #allocation0 [shape = 'u32[]', space=smem, size = 0x4, offset = 0x4, fixed_abs, tag = 'smem constant byte address 0x4 - core index']
  #allocation1 [shape = 'u32[144,128]{1,0:T(1,128)}', space=vmem, size = 0x12000, scoped, tag = 'internal scratch']
  %s0 = inlined_call_operand.hbm [shape: bf16[1024,128], index: 0, kind: input, shape index: {}]
  %s1 = inlined_call_operand.hbm [shape: bf16[128,128], index: 1, kind: input, shape index: {}]
  %s2 = inlined_call_operand.hbm [shape: bf16[1024,128], index: 2, kind: output, shape index: {0}]
  %s3 = inlined_call_operand.hbm [shape: f32[1,1,128], index: 3, kind: output, shape index: {1}]
  %s4 = inlined_call_operand.hbm [shape: f32[1,1,128], index: 4, kind: output, shape index: {2}]
  %5 = xla_tuple %s2, %s3, %s4
  %s6 = sld [smem:[#allocation0]]
  $region42: #{tpu_custom_call.1} parent=0
    _
  %s8 = ssub.s32 1, %s6
  %s9 = scalar_select 0, %s8, %s6
  $region1: #{tpu_custom_call.1} parent=0
    #allocation2 [shape = 'u8[262144]{0}', space=vmem, size = 0x40000, scoped, tag = 'input window, operand 0, single buffered']
    #allocation3 [shape = 's32[1]{0}', space=sflag, size = 0x4, scoped, tag = 'scoped memory for tpu_custom_call.1']
    #allocation4 [shape = 's32[1]{0}', space=sflag, size = 0x4, scoped, tag = 'scoped memory for tpu_custom_call.1']
    #allocation5 [shape = 'u8[32768]{0}', space=vmem, size = 0x8000, scoped, tag = 'input window, operand 1, single buffered']
    #allocation6 [shape = 's32[1]{0}', space=sflag, size = 0x4, scoped, tag = 'scoped memory for tpu_custom_call.1']
    #allocation7 [shape = 'u8[262144]{0}', space=vmem, size = 0x40000, scoped, tag = 'output window, operand 0, single buffered']
    #allocation8 [shape = 'u8[512]{0}', space=vmem, size = 0x400, scoped, tag = 'output window, operand 1, single buffered']
    #allocation9 [shape = 's32[1]{0}', space=sflag, size = 0x4, scoped, tag = 'scoped memory for tpu_custom_call.1']
    #allocation10 [shape = 'u8[512]{0}', space=vmem, size = 0x400, scoped, tag = 'output window, operand 2, single buffered']
    %10 = vsyncpa [#allocation3], 0
    %11 = vsyncpa [#allocation6], 0
    %12 = vsyncpa [#allocation4], 0
    %13 = vsyncpa [#allocation9], 0
    // Predicated region
    $region2: #{tpu_custom_call.1} parent=1 // pred_check
      _
    $region3: #{tpu_custom_call.1} parent=1 // pred_check_branch
      %15 = sbr.rel (0) target = $region5
    $region4: #{tpu_custom_call.1} parent=1 // pred_region
      %s17 = ssub.s32 8192, 8192
      %18 = vsyncadd [#allocation3], %s17
      %s19 = sshll.u32 [#allocation2], 4
      %s20 = int_to_ptr.vmem [resolvable:$true] %s19
      %25 = dma.hbm_to_vmem [thread:$0]  %s0, 8192, %s20, [#allocation3], 64, 64, 4
    $region5: #{tpu_custom_call.1} parent=1 // pred_fallthru
      _
    // Predicated region
    $region6: #{tpu_custom_call.1} parent=1 // pred_check
      _
    $region7: #{tpu_custom_call.1} parent=1 // pred_check_branch
      %27 = sbr.rel (0) target = $region9
    $region8: #{tpu_custom_call.1} parent=1 // pred_region
      %s29 = ssub.s32 1024, 1024
      %30 = vsyncadd [#allocation6], %s29
      %s31 = sshll.u32 [#allocation5], 4
      %s32 = int_to_ptr.vmem [resolvable:$true] %s31
      %37 = dma.hbm_to_vmem [thread:$0]  %s1, 1024, %s32, [#allocation6], 64, 64, 4
    $region9: #{tpu_custom_call.1} parent=1 // pred_fallthru
      _
    // Predicated region
    $region10: #{tpu_custom_call.1} parent=1 // pred_check
      _
    $region11: #{tpu_custom_call.1} parent=1 // pred_check_branch
      %39 = sbr.rel (0) target = $region13
    $region12: #{tpu_custom_call.1} parent=1 // pred_region
      %40 = dma.done [#allocation3], 8192
    $region13: #{tpu_custom_call.1} parent=1 // pred_fallthru
      _
    // Predicated region
    $region14: #{tpu_custom_call.1} parent=1 // pred_check
      _
    $region15: #{tpu_custom_call.1} parent=1 // pred_check_branch
      %42 = sbr.rel (0) target = $region17
    $region16: #{tpu_custom_call.1} parent=1 // pred_region
      %43 = dma.done [#allocation6], 1024
    $region17: #{tpu_custom_call.1} parent=1 // pred_fallthru
      _
    %v45 = vld [vmem:[#allocation2] sm:$0xf]
    %v46 = vld [vmem:[#allocation2 + $0x4] sm:$0xf]
    %v47 = vld [vmem:[#allocation2 + $0x8] sm:$0xf]
    %v48 = vld [vmem:[#allocation2 + $0xc] sm:$0xf]
    %v49 = vld [vmem:[#allocation2 + $0x10] sm:$0xf]
    %v50 = vld [vmem:[#allocation2 + $0x14] sm:$0xf]
    %v51 = vld [vmem:[#allocation2 + $0x18] sm:$0xf]
    %v52 = vld [vmem:[#allocation2 + $0x1c] sm:$0xf]
    %v53 = vld [vmem:[#allocation2 + $0x20] sm:$0xf]
    %v54 = vld [vmem:[#allocation2 + $0x24] sm:$0xf]
    %v55 = vld [vmem:[#allocation2 + $0x28] sm:$0xf]
    %v56 = vld [vmem:[#allocation2 + $0x2c] sm:$0xf]
    %v57 = vld [vmem:[#allocation2 + $0x30] sm:$0xf]
    %v58 = vld [vmem:[#allocation2 + $0x34] sm:$0xf]
    %v59 = vld [vmem:[#allocation2 + $0x38] sm:$0xf]
    %v60 = vld [vmem:[#allocation2 + $0x3c] sm:$0xf]
    %v61 = vld [vmem:[#allocation2 + $0x40] sm:$0xf]
    %v62 = vld [vmem:[#allocation2 + $0x44] sm:$0xf]
    %v63 = vld [vmem:[#allocation2 + $0x48] sm:$0xf]
    %v64 = vld [vmem:[#allocation2 + $0x4c] sm:$0xf]
    %v65 = vld [vmem:[#allocation2 + $0x50] sm:$0xf]
    %v66 = vld [vmem:[#allocation2 + $0x54] sm:$0xf]
    %v67 = vld [vmem:[#allocation2 + $0x58] sm:$0xf]
    %v68 = vld [vmem:[#allocation2 + $0x5c] sm:$0xf]
    %v69 = vld [vmem:[#allocation2 + $0x60] sm:$0xf]
    %v70 = vld [vmem:[#allocation2 + $0x64] sm:$0xf]
    %v71 = vld [vmem:[#allocation2 + $0x68] sm:$0xf]
    %v72 = vld [vmem:[#allocation2 + $0x6c] sm:$0xf]
    %v73 = vld [vmem:[#allocation2 + $0x70] sm:$0xf]
    %v74 = vld [vmem:[#allocation2 + $0x74] sm:$0xf]
    %v75 = vld [vmem:[#allocation2 + $0x78] sm:$0xf]
    %v76 = vld [vmem:[#allocation2 + $0x7c] sm:$0xf]
    %v77 = vld [vmem:[#allocation2 + $0x80] sm:$0xf]
    %v78 = vld [vmem:[#allocation2 + $0x84] sm:$0xf]
    %v79 = vld [vmem:[#allocation2 + $0x88] sm:$0xf]
    %v80 = vld [vmem:[#allocation2 + $0x8c] sm:$0xf]
    %v81 = vld [vmem:[#allocation2 + $0x90] sm:$0xf]
    %v82 = vld [vmem:[#allocation2 + $0x94] sm:$0xf]
    %v83 = vld [vmem:[#allocation2 + $0x98] sm:$0xf]
    %v84 = vld [vmem:[#allocation2 + $0x9c] sm:$0xf]
    %v85 = vld [vmem:[#allocation2 + $0xa0] sm:$0xf]
    %v86 = vld [vmem:[#allocation2 + $0xa4] sm:$0xf]
    %v87 = vld [vmem:[#allocation2 + $0xa8] sm:$0xf]
    %v88 = vld [vmem:[#allocation2 + $0xac] sm:$0xf]
    %v89 = vld [vmem:[#allocation2 + $0xb0] sm:$0xf]
    %v90 = vld [vmem:[#allocation2 + $0xb4] sm:$0xf]
    %v91 = vld [vmem:[#allocation2 + $0xb8] sm:$0xf]
    %v92 = vld [vmem:[#allocation2 + $0xbc] sm:$0xf]
    %v93 = vld [vmem:[#allocation2 + $0xc0] sm:$0xf]
    %v94 = vld [vmem:[#allocation2 + $0xc4] sm:$0xf]
    %v95 = vld [vmem:[#allocation2 + $0xc8] sm:$0xf]
    %v96 = vld [vmem:[#allocation2 + $0xcc] sm:$0xf]
    %v97 = vld [vmem:[#allocation2 + $0xd0] sm:$0xf]
    %v98 = vld [vmem:[#allocation2 + $0xd4] sm:$0xf]
    %v99 = vld [vmem:[#allocation2 + $0xd8] sm:$0xf]
    %v100 = vld [vmem:[#allocation2 + $0xdc] sm:$0xf]
    %v101 = vld [vmem:[#allocation2 + $0xe0] sm:$0xf]
    %v102 = vld [vmem:[#allocation2 + $0xe4] sm:$0xf]
    %v103 = vld [vmem:[#allocation2 + $0xe8] sm:$0xf]
    %v104 = vld [vmem:[#allocation2 + $0xec] sm:$0xf]
    %v105 = vld [vmem:[#allocation2 + $0xf0] sm:$0xf]
    %v106 = vld [vmem:[#allocation2 + $0xf4] sm:$0xf]
    %v107 = vld [vmem:[#allocation2 + $0xf8] sm:$0xf]
    %v108 = vld [vmem:[#allocation2 + $0xfc] sm:$0xf]
    %v109 = vld [vmem:[#allocation2 + $0x100] sm:$0xf]
    %v110 = vld [vmem:[#allocation2 + $0x104] sm:$0xf]
    %v111 = vld [vmem:[#allocation2 + $0x108] sm:$0xf]
    %v112 = vld [vmem:[#allocation2 + $0x10c] sm:$0xf]
    %v113 = vld [vmem:[#allocation2 + $0x110] sm:$0xf]
    %v114 = vld [vmem:[#allocation2 + $0x114] sm:$0xf]
    %v115 = vld [vmem:[#allocation2 + $0x118] sm:$0xf]
    %v116 = vld [vmem:[#allocation2 + $0x11c] sm:$0xf]
    %v117 = vld [vmem:[#allocation2 + $0x120] sm:$0xf]
    %v118 = vld [vmem:[#allocation2 + $0x124] sm:$0xf]
    %v119 = vld [vmem:[#allocation2 + $0x128] sm:$0xf]
    %v120 = vld [vmem:[#allocation2 + $0x12c] sm:$0xf]
    %v121 = vld [vmem:[#allocation2 + $0x130] sm:$0xf]
    %v122 = vld [vmem:[#allocation2 + $0x134] sm:$0xf]
    %v123 = vld [vmem:[#allocation2 + $0x138] sm:$0xf]
    %v124 = vld [vmem:[#allocation2 + $0x13c] sm:$0xf]
    %v125 = vld [vmem:[#allocation2 + $0x140] sm:$0xf]
    %v126 = vld [vmem:[#allocation2 + $0x144] sm:$0xf]
    %v127 = vld [vmem:[#allocation2 + $0x148] sm:$0xf]
    %v128 = vld [vmem:[#allocation2 + $0x14c] sm:$0xf]
    %v129 = vld [vmem:[#allocation2 + $0x150] sm:$0xf]
    %v130 = vld [vmem:[#allocation2 + $0x154] sm:$0xf]
    %v131 = vld [vmem:[#allocation2 + $0x158] sm:$0xf]
    %v132 = vld [vmem:[#allocation2 + $0x15c] sm:$0xf]
    %v133 = vld [vmem:[#allocation2 + $0x160] sm:$0xf]
    %v134 = vld [vmem:[#allocation2 + $0x164] sm:$0xf]
    %v135 = vld [vmem:[#allocation2 + $0x168] sm:$0xf]
    %v136 = vld [vmem:[#allocation2 + $0x16c] sm:$0xf]
    %v137 = vld [vmem:[#allocation2 + $0x170] sm:$0xf]
    %v138 = vld [vmem:[#allocation2 + $0x174] sm:$0xf]
    %v139 = vld [vmem:[#allocation2 + $0x178] sm:$0xf]
    %v140 = vld [vmem:[#allocation2 + $0x17c] sm:$0xf]
    %v141 = vld [vmem:[#allocation2 + $0x180] sm:$0xf]
    %v142 = vld [vmem:[#allocation2 + $0x184] sm:$0xf]
    %v143 = vld [vmem:[#allocation2 + $0x188] sm:$0xf]
    %v144 = vld [vmem:[#allocation2 + $0x18c] sm:$0xf]
    %v145 = vld [vmem:[#allocation2 + $0x190] sm:$0xf]
    %v146 = vld [vmem:[#allocation2 + $0x194] sm:$0xf]
    %v147 = vld [vmem:[#allocation2 + $0x198] sm:$0xf]
    %v148 = vld [vmem:[#allocation2 + $0x19c] sm:$0xf]
    %v149 = vld [vmem:[#allocation2 + $0x1a0] sm:$0xf]
    %v150 = vld [vmem:[#allocation2 + $0x1a4] sm:$0xf]
    %v151 = vld [vmem:[#allocation2 + $0x1a8] sm:$0xf]
    %v152 = vld [vmem:[#allocation2 + $0x1ac] sm:$0xf]
    %v153 = vld [vmem:[#allocation2 + $0x1b0] sm:$0xf]
    %v154 = vld [vmem:[#allocation2 + $0x1b4] sm:$0xf]
    %v155 = vld [vmem:[#allocation2 + $0x1b8] sm:$0xf]
    %v156 = vld [vmem:[#allocation2 + $0x1bc] sm:$0xf]
    %v157 = vld [vmem:[#allocation2 + $0x1c0] sm:$0xf]
    %v158 = vld [vmem:[#allocation2 + $0x1c4] sm:$0xf]
    %v159 = vld [vmem:[#allocation2 + $0x1c8] sm:$0xf]
    %v160 = vld [vmem:[#allocation2 + $0x1cc] sm:$0xf]
    %v161 = vld [vmem:[#allocation2 + $0x1d0] sm:$0xf]
    %v162 = vld [vmem:[#allocation2 + $0x1d4] sm:$0xf]
    %v163 = vld [vmem:[#allocation2 + $0x1d8] sm:$0xf]
    %v164 = vld [vmem:[#allocation2 + $0x1dc] sm:$0xf]
    %v165 = vld [vmem:[#allocation2 + $0x1e0] sm:$0xf]
    %v166 = vld [vmem:[#allocation2 + $0x1e4] sm:$0xf]
    %v167 = vld [vmem:[#allocation2 + $0x1e8] sm:$0xf]
    %v168 = vld [vmem:[#allocation2 + $0x1ec] sm:$0xf]
    %v169 = vld [vmem:[#allocation2 + $0x1f0] sm:$0xf]
    %v170 = vld [vmem:[#allocation2 + $0x1f4] sm:$0xf]
    %v171 = vld [vmem:[#allocation2 + $0x1f8] sm:$0xf]
    %v172 = vld [vmem:[#allocation2 + $0x1fc] sm:$0xf]
    %v173 = vld [vmem:[#allocation5] sm:$0xf]
    %v174 = vld [vmem:[#allocation5 + $0x4] sm:$0xf]
    %v175 = vld [vmem:[#allocation5 + $0x8] sm:$0xf]
    %v176 = vld [vmem:[#allocation5 + $0xc] sm:$0xf]
    %v177 = vld [vmem:[#allocation5 + $0x10] sm:$0xf]
    %v178 = vld [vmem:[#allocation5 + $0x14] sm:$0xf]
    %v179 = vld [vmem:[#allocation5 + $0x18] sm:$0xf]
    %v180 = vld [vmem:[#allocation5 + $0x1c] sm:$0xf]
    %v181 = vld [vmem:[#allocation5 + $0x20] sm:$0xf]
    %v182 = vld [vmem:[#allocation5 + $0x24] sm:$0xf]
    %v183 = vld [vmem:[#allocation5 + $0x28] sm:$0xf]
    %v184 = vld [vmem:[#allocation5 + $0x2c] sm:$0xf]
    %v185 = vld [vmem:[#allocation5 + $0x30] sm:$0xf]
    %v186 = vld [vmem:[#allocation5 + $0x34] sm:$0xf]
    %v187 = vld [vmem:[#allocation5 + $0x38] sm:$0xf]
    %v188 = vld [vmem:[#allocation5 + $0x3c] sm:$0xf]
    %v317 = vunpack.c.l.b16 %v45
    %v318 = vunpack.c.l.b16 %v46
    %v319 = vunpack.c.l.b16 %v47
    %v320 = vunpack.c.l.b16 %v48
    %v321 = vunpack.c.l.b16 %v49
    %v322 = vunpack.c.l.b16 %v50
    %v323 = vunpack.c.l.b16 %v51
    %v324 = vunpack.c.l.b16 %v52
    %v325 = vunpack.c.l.b16 %v53
    %v326 = vunpack.c.l.b16 %v54
    %v327 = vunpack.c.l.b16 %v55
    %v328 = vunpack.c.l.b16 %v56
    %v329 = vunpack.c.l.b16 %v57
    %v330 = vunpack.c.l.b16 %v58
    %v331 = vunpack.c.l.b16 %v59
    %v332 = vunpack.c.l.b16 %v60
    %v333 = vunpack.c.l.b16 %v61
    %v334 = vunpack.c.l.b16 %v62
    %v335 = vunpack.c.l.b16 %v63
    %v336 = vunpack.c.l.b16 %v64
    %v337 = vunpack.c.l.b16 %v65
    %v338 = vunpack.c.l.b16 %v66
    %v339 = vunpack.c.l.b16 %v67
    %v340 = vunpack.c.l.b16 %v68
    %v341 = vunpack.c.l.b16 %v69
    %v342 = vunpack.c.l.b16 %v70
    %v343 = vunpack.c.l.b16 %v71
    %v344 = vunpack.c.l.b16 %v72
    %v345 = vunpack.c.l.b16 %v73
    %v346 = vunpack.c.l.b16 %v74
    %v347 = vunpack.c.l.b16 %v75
    %v348 = vunpack.c.l.b16 %v76
    %v349 = vunpack.c.l.b16 %v77
    %v350 = vunpack.c.l.b16 %v78
    %v351 = vunpack.c.l.b16 %v79
    %v352 = vunpack.c.l.b16 %v80
    %v353 = vunpack.c.l.b16 %v81
    %v354 = vunpack.c.l.b16 %v82
    %v355 = vunpack.c.l.b16 %v83
    %v356 = vunpack.c.l.b16 %v84
    %v357 = vunpack.c.l.b16 %v85
    %v358 = vunpack.c.l.b16 %v86
    %v359 = vunpack.c.l.b16 %v87
    %v360 = vunpack.c.l.b16 %v88
    %v361 = vunpack.c.l.b16 %v89
    %v362 = vunpack.c.l.b16 %v90
    %v363 = vunpack.c.l.b16 %v91
    %v364 = vunpack.c.l.b16 %v92
    %v365 = vunpack.c.l.b16 %v93
    %v366 = vunpack.c.l.b16 %v94
    %v367 = vunpack.c.l.b16 %v95
    %v368 = vunpack.c.l.b16 %v96
    %v369 = vunpack.c.l.b16 %v97
    %v370 = vunpack.c.l.b16 %v98
    %v371 = vunpack.c.l.b16 %v99
    %v372 = vunpack.c.l.b16 %v100
    %v373 = vunpack.c.l.b16 %v101
    %v374 = vunpack.c.l.b16 %v102
    %v375 = vunpack.c.l.b16 %v103
    %v376 = vunpack.c.l.b16 %v104
    %v377 = vunpack.c.l.b16 %v105
    %v378 = vunpack.c.l.b16 %v106
    %v379 = vunpack.c.l.b16 %v107
    %v380 = vunpack.c.l.b16 %v108
    %v381 = vunpack.c.l.b16 %v109
    %v382 = vunpack.c.l.b16 %v110
    %v383 = vunpack.c.l.b16 %v111
    %v384 = vunpack.c.l.b16 %v112
    %v385 = vunpack.c.l.b16 %v113
    %v386 = vunpack.c.l.b16 %v114
    %v387 = vunpack.c.l.b16 %v115
    %v388 = vunpack.c.l.b16 %v116
    %v389 = vunpack.c.l.b16 %v117
    %v390 = vunpack.c.l.b16 %v118
    %v391 = vunpack.c.l.b16 %v119
    %v392 = vunpack.c.l.b16 %v120
    %v393 = vunpack.c.l.b16 %v121
    %v394 = vunpack.c.l.b16 %v122
    %v395 = vunpack.c.l.b16 %v123
    %v396 = vunpack.c.l.b16 %v124
    %v397 = vunpack.c.l.b16 %v125
    %v398 = vunpack.c.l.b16 %v126
    %v399 = vunpack.c.l.b16 %v127
    %v400 = vunpack.c.l.b16 %v128
    %v401 = vunpack.c.l.b16 %v129
    %v402 = vunpack.c.l.b16 %v130
    %v403 = vunpack.c.l.b16 %v131
    %v404 = vunpack.c.l.b16 %v132
    %v405 = vunpack.c.l.b16 %v133
    %v406 = vunpack.c.l.b16 %v134
    %v407 = vunpack.c.l.b16 %v135
    %v408 = vunpack.c.l.b16 %v136
    %v409 = vunpack.c.l.b16 %v137
    %v410 = vunpack.c.l.b16 %v138
    %v411 = vunpack.c.l.b16 %v139
    %v412 = vunpack.c.l.b16 %v140
    %v413 = vunpack.c.l.b16 %v141
    %v414 = vunpack.c.l.b16 %v142
    %v415 = vunpack.c.l.b16 %v143
    %v416 = vunpack.c.l.b16 %v144
    %v417 = vunpack.c.l.b16 %v145
    %v418 = vunpack.c.l.b16 %v146
    %v419 = vunpack.c.l.b16 %v147
    %v420 = vunpack.c.l.b16 %v148
    %v421 = vunpack.c.l.b16 %v149
    %v422 = vunpack.c.l.b16 %v150
    %v423 = vunpack.c.l.b16 %v151
    %v424 = vunpack.c.l.b16 %v152
    %v425 = vunpack.c.l.b16 %v153
    %v426 = vunpack.c.l.b16 %v154
    %v427 = vunpack.c.l.b16 %v155
    %v428 = vunpack.c.l.b16 %v156
    %v429 = vunpack.c.l.b16 %v157
    %v430 = vunpack.c.l.b16 %v158
    %v431 = vunpack.c.l.b16 %v159
    %v432 = vunpack.c.l.b16 %v160
    %v433 = vunpack.c.l.b16 %v161
    %v434 = vunpack.c.l.b16 %v162
    %v435 = vunpack.c.l.b16 %v163
    %v436 = vunpack.c.l.b16 %v164
    %v437 = vunpack.c.l.b16 %v165
    %v438 = vunpack.c.l.b16 %v166
    %v439 = vunpack.c.l.b16 %v167
    %v440 = vunpack.c.l.b16 %v168
    %v441 = vunpack.c.l.b16 %v169
    %v442 = vunpack.c.l.b16 %v170
    %v443 = vunpack.c.l.b16 %v171
    %v444 = vunpack.c.l.b16 %v172
    %v445 = vpack.c.b16 %v318, %v317
    %v446 = vpack.c.b16 %v320, %v319
    %v447 = vpack.c.b16 %v322, %v321
    %v448 = vpack.c.b16 %v324, %v323
    %v449 = vpack.c.b16 %v326, %v325
    %v450 = vpack.c.b16 %v328, %v327
    %v451 = vpack.c.b16 %v330, %v329
    %v452 = vpack.c.b16 %v332, %v331
    %v453 = vpack.c.b16 %v334, %v333
    %v454 = vpack.c.b16 %v336, %v335
    %v455 = vpack.c.b16 %v338, %v337
    %v456 = vpack.c.b16 %v340, %v339
    %v457 = vpack.c.b16 %v342, %v341
    %v458 = vpack.c.b16 %v344, %v343
    %v459 = vpack.c.b16 %v346, %v345
    %v460 = vpack.c.b16 %v348, %v347
    %v461 = vpack.c.b16 %v350, %v349
    %v462 = vpack.c.b16 %v352, %v351
    %v463 = vpack.c.b16 %v354, %v353
    %v464 = vpack.c.b16 %v356, %v355
    %v465 = vpack.c.b16 %v358, %v357
    %v466 = vpack.c.b16 %v360, %v359
    %v467 = vpack.c.b16 %v362, %v361
    %v468 = vpack.c.b16 %v364, %v363
    %v469 = vpack.c.b16 %v366, %v365
    %v470 = vpack.c.b16 %v368, %v367
    %v471 = vpack.c.b16 %v370, %v369
    %v472 = vpack.c.b16 %v372, %v371
    %v473 = vpack.c.b16 %v374, %v373
    %v474 = vpack.c.b16 %v376, %v375
    %v475 = vpack.c.b16 %v378, %v377
    %v476 = vpack.c.b16 %v380, %v379
    %v477 = vpack.c.b16 %v382, %v381
    %v478 = vpack.c.b16 %v384, %v383
    %v479 = vpack.c.b16 %v386, %v385
    %v480 = vpack.c.b16 %v388, %v387
    %v481 = vpack.c.b16 %v390, %v389
    %v482 = vpack.c.b16 %v392, %v391
    %v483 = vpack.c.b16 %v394, %v393
    %v484 = vpack.c.b16 %v396, %v395
    %v485 = vpack.c.b16 %v398, %v397
    %v486 = vpack.c.b16 %v400, %v399
    %v487 = vpack.c.b16 %v402, %v401
    %v488 = vpack.c.b16 %v404, %v403
    %v489 = vpack.c.b16 %v406, %v405
    %v490 = vpack.c.b16 %v408, %v407
    %v491 = vpack.c.b16 %v410, %v409
    %v492 = vpack.c.b16 %v412, %v411
    %v493 = vpack.c.b16 %v414, %v413
    %v494 = vpack.c.b16 %v416, %v415
    %v495 = vpack.c.b16 %v418, %v417
    %v496 = vpack.c.b16 %v420, %v419
    %v497 = vpack.c.b16 %v422, %v421
    %v498 = vpack.c.b16 %v424, %v423
    %v499 = vpack.c.b16 %v426, %v425
    %v500 = vpack.c.b16 %v428, %v427
    %v501 = vpack.c.b16 %v430, %v429
    %v502 = vpack.c.b16 %v432, %v431
    %v503 = vpack.c.b16 %v434, %v433
    %v504 = vpack.c.b16 %v436, %v435
    %v505 = vpack.c.b16 %v438, %v437
    %v506 = vpack.c.b16 %v440, %v439
    %v507 = vpack.c.b16 %v442, %v441
    %v508 = vpack.c.b16 %v444, %v443
    %v589 = vunpack.c.l.b16 %v173
    %v590 = vunpack.c.l.b16 %v174
    %v591 = vunpack.c.l.b16 %v175
    %v592 = vunpack.c.l.b16 %v176
    %v593 = vunpack.c.l.b16 %v177
    %v594 = vunpack.c.l.b16 %v178
    %v595 = vunpack.c.l.b16 %v179
    %v596 = vunpack.c.l.b16 %v180
    %v597 = vunpack.c.l.b16 %v181
    %v598 = vunpack.c.l.b16 %v182
    %v599 = vunpack.c.l.b16 %v183
    %v600 = vunpack.c.l.b16 %v184
    %v601 = vunpack.c.l.b16 %v185
    %v602 = vunpack.c.l.b16 %v186
    %v603 = vunpack.c.l.b16 %v187
    %v604 = vunpack.c.l.b16 %v188
    %v605 = vpack.c.b16 %v590, %v589
    %v606 = vpack.c.b16 %v592, %v591
    %v607 = vpack.c.b16 %v594, %v593
    %v608 = vpack.c.b16 %v596, %v595
    %v609 = vpack.c.b16 %v598, %v597
    %v610 = vpack.c.b16 %v600, %v599
    %v611 = vpack.c.b16 %v602, %v601
    %v612 = vpack.c.b16 %v604, %v603
    %621 = vmatprep.subr.bf16.mxu0 0
    %622 = vmatpush1.bf16.msra.mxu0 %v605
    %623 = vmatprep.subr.bf16.mxu0 0
    %624 = vmatpush1.bf16.msra.mxu0 %v606
    %625 = vmatprep.subr.bf16.mxu0 0
    %626 = vmatpush1.bf16.msra.mxu0 %v607
    %627 = vmatprep.subr.bf16.mxu0 0
    %628 = vmatpush1.bf16.msra.mxu0 %v608
    %629 = vmatprep.subr.bf16.mxu0 0
    %630 = vmatpush1.bf16.msra.mxu0 %v609
    %631 = vmatprep.subr.bf16.mxu0 0
    %632 = vmatpush1.bf16.msra.mxu0 %v610
    %633 = vmatprep.subr.bf16.mxu0 0
    %634 = vmatpush1.bf16.msra.mxu0 %v611
    %635 = vmatprep.subr.bf16.mxu0 0
    %636 = vmatpush1.bf16.msra.mxu0 %v612
    %637 = vmatprep.subr.bf16.mxu0 0
    %638 = vmatpush1.bf16.msra.mxu0 0
    %639 = vmatprep.subr.bf16.mxu0 0
    %640 = vmatpush1.bf16.msra.mxu0 0
    %641 = vmatprep.subr.bf16.mxu0 0
    %642 = vmatpush1.bf16.msra.mxu0 0
    %643 = vmatprep.subr.bf16.mxu0 0
    %644 = vmatpush1.bf16.msra.mxu0 0
    %645 = vmatprep.subr.bf16.mxu0 0
    %646 = vmatpush1.bf16.msra.mxu0 0
    %647 = vmatprep.subr.bf16.mxu0 0
    %648 = vmatpush1.bf16.msra.mxu0 0
    %649 = vmatprep.subr.bf16.mxu0 0
    %650 = vmatpush1.bf16.msra.mxu0 0
    %651 = vmatprep.subr.bf16.mxu0 0
    %652 = vmatpush1.bf16.msra.mxu0 0
    %653 = vmatprep.mubr.bf16.mxu0 0
    %654 = vmatmul.mubr.bf16.gmra.mrb[0].mxu0 %v445
    %v655 = vpop.f32.mrb[0].mxu0
    %v656 = vadd.f32 0.0, %v655
    %v657 = vpop.f32.mrb[0].mxu0
    %v658 = vpop.f32.mrb[0].mxu0
    %v659 = vadd.f32 0.0, %v658
    %v660 = vpop.f32.mrb[0].mxu0
    %661 = vmatprep.mubr.bf16.mxu0 0
    %662 = vmatmul.mubr.bf16.gmra.mrb[0].mxu0 %v446
    %v663 = vpop.f32.mrb[0].mxu0
    %v664 = vadd.f32 0.0, %v663
    %v665 = vpop.f32.mrb[0].mxu0
    %v666 = vpop.f32.mrb[0].mxu0
    %v667 = vadd.f32 0.0, %v666
    %v668 = vpop.f32.mrb[0].mxu0
    %669 = vmatprep.mubr.bf16.mxu0 0
    %670 = vmatmul.mubr.bf16.gmra.mrb[0].mxu0 %v447
    %v671 = vpop.f32.mrb[0].mxu0
    %v672 = vadd.f32 0.0, %v671
    %v673 = vpop.f32.mrb[0].mxu0
    %v674 = vpop.f32.mrb[0].mxu0
    %v675 = vadd.f32 0.0, %v674
    %v676 = vpop.f32.mrb[0].mxu0
    %677 = vmatprep.mubr.bf16.mxu0 0
    %678 = vmatmul.mubr.bf16.gmra.mrb[0].mxu0 %v448
    %v679 = vpop.f32.mrb[0].mxu0
    %v680 = vadd.f32 0.0, %v679
    %v681 = vpop.f32.mrb[0].mxu0
    %v682 = vpop.f32.mrb[0].mxu0
    %v683 = vadd.f32 0.0, %v682
    %v684 = vpop.f32.mrb[0].mxu0
    %685 = vmatprep.mubr.bf16.mxu0 0
    %686 = vmatmul.mubr.bf16.gmra.mrb[0].mxu0 %v449
    %v687 = vpop.f32.mrb[0].mxu0
    %v688 = vadd.f32 0.0, %v687
    %v689 = vpop.f32.mrb[0].mxu0
    %v690 = vpop.f32.mrb[0].mxu0
    %v691 = vadd.f32 0.0, %v690
    %v692 = vpop.f32.mrb[0].mxu0
    %693 = vmatprep.mubr.bf16.mxu0 0
    %694 = vmatmul.mubr.bf16.gmra.mrb[0].mxu0 %v450
    %v695 = vpop.f32.mrb[0].mxu0
    %v696 = vadd.f32 0.0, %v695
    %v697 = vpop.f32.mrb[0].mxu0
    %v698 = vpop.f32.mrb[0].mxu0
    %v699 = vadd.f32 0.0, %v698
    %v700 = vpop.f32.mrb[0].mxu0
    %701 = vmatprep.mubr.bf16.mxu0 0
    %702 = vmatmul.mubr.bf16.gmra.mrb[0].mxu0 %v451
    %v703 = vpop.f32.mrb[0].mxu0
    %v704 = vadd.f32 0.0, %v703
    %v705 = vpop.f32.mrb[0].mxu0
    %v706 = vpop.f32.mrb[0].mxu0
    %v707 = vadd.f32 0.0, %v706
    %v708 = vpop.f32.mrb[0].mxu0
    %709 = vmatprep.mubr.bf16.mxu0 0
    %710 = vmatmul.mubr.bf16.gmra.mrb[0].mxu0 %v452
    %v711 = vpop.f32.mrb[0].mxu0
    %v712 = vadd.f32 0.0, %v711
    %v713 = vpop.f32.mrb[0].mxu0
    %v714 = vpop.f32.mrb[0].mxu0
    %v715 = vadd.f32 0.0, %v714
    %v716 = vpop.f32.mrb[0].mxu0
    %717 = vmatprep.mubr.bf16.mxu0 0
    %718 = vmatmul.mubr.bf16.gmra.mrb[0].mxu0 %v453
    %v719 = vpop.f32.mrb[0].mxu0
    %v720 = vadd.f32 0.0, %v719
    %v721 = vpop.f32.mrb[0].mxu0
    %v722 = vpop.f32.mrb[0].mxu0
    %v723 = vadd.f32 0.0, %v722
    %v724 = vpop.f32.mrb[0].mxu0
    %725 = vmatprep.mubr.bf16.mxu0 0
    %726 = vmatmul.mubr.bf16.gmra.mrb[0].mxu0 %v454
    %v727 = vpop.f32.mrb[0].mxu0
    %v728 = vadd.f32 0.0, %v727
    %v729 = vpop.f32.mrb[0].mxu0
    %v730 = vpop.f32.mrb[0].mxu0
    %v731 = vadd.f32 0.0, %v730
    %v732 = vpop.f32.mrb[0].mxu0
    %733 = vmatprep.mubr.bf16.mxu0 0
    %734 = vmatmul.mubr.bf16.gmra.mrb[0].mxu0 %v455
    %v735 = vpop.f32.mrb[0].mxu0
    %v736 = vadd.f32 0.0, %v735
    %v737 = vpop.f32.mrb[0].mxu0
    %v738 = vpop.f32.mrb[0].mxu0
    %v739 = vadd.f32 0.0, %v738
    %v740 = vpop.f32.mrb[0].mxu0
    %741 = vmatprep.mubr.bf16.mxu0 0
    %742 = vmatmul.mubr.bf16.gmra.mrb[0].mxu0 %v456
    %v743 = vpop.f32.mrb[0].mxu0
    %v744 = vadd.f32 0.0, %v743
    %v745 = vpop.f32.mrb[0].mxu0
    %v746 = vpop.f32.mrb[0].mxu0
    %v747 = vadd.f32 0.0, %v746
    %v748 = vpop.f32.mrb[0].mxu0
    %749 = vmatprep.mubr.bf16.mxu0 0
    %750 = vmatmul.mubr.bf16.gmra.mrb[0].mxu0 %v457
    %v751 = vpop.f32.mrb[0].mxu0
    %v752 = vadd.f32 0.0, %v751
    %v753 = vpop.f32.mrb[0].mxu0
    %v754 = vpop.f32.mrb[0].mxu0
    %v755 = vadd.f32 0.0, %v754
    %v756 = vpop.f32.mrb[0].mxu0
    %757 = vmatprep.mubr.bf16.mxu0 0
    %758 = vmatmul.mubr.bf16.gmra.mrb[0].mxu0 %v458
    %v759 = vpop.f32.mrb[0].mxu0
    %v760 = vadd.f32 0.0, %v759
    %v761 = vpop.f32.mrb[0].mxu0
    %v762 = vpop.f32.mrb[0].mxu0
    %v763 = vadd.f32 0.0, %v762
    %v764 = vpop.f32.mrb[0].mxu0
    %765 = vmatprep.mubr.bf16.mxu0 0
    %766 = vmatmul.mubr.bf16.gmra.mrb[0].mxu0 %v459
    %v767 = vpop.f32.mrb[0].mxu0
    %v768 = vadd.f32 0.0, %v767
    %v769 = vpop.f32.mrb[0].mxu0
    %v770 = vpop.f32.mrb[0].mxu0
    %v771 = vadd.f32 0.0, %v770
    %v772 = vpop.f32.mrb[0].mxu0
    %773 = vmatprep.mubr.bf16.mxu0 0
    %774 = vmatmul.mubr.bf16.gmra.mrb[0].mxu0 %v460
    %v775 = vpop.f32.mrb[0].mxu0
    %v776 = vadd.f32 0.0, %v775
    %v777 = vpop.f32.mrb[0].mxu0
    %v778 = vpop.f32.mrb[0].mxu0
    %v779 = vadd.f32 0.0, %v778
    %v780 = vpop.f32.mrb[0].mxu0
    %781 = vmatprep.mubr.bf16.mxu0 0
    %782 = vmatmul.mubr.bf16.gmra.mrb[0].mxu0 %v461
    %v783 = vpop.f32.mrb[0].mxu0
    %v784 = vadd.f32 0.0, %v783
    %v785 = vpop.f32.mrb[0].mxu0
    %v786 = vpop.f32.mrb[0].mxu0
    %v787 = vadd.f32 0.0, %v786
    %v788 = vpop.f32.mrb[0].mxu0
    %789 = vmatprep.mubr.bf16.mxu0 0
    %790 = vmatmul.mubr.bf16.gmra.mrb[0].mxu0 %v462
    %v791 = vpop.f32.mrb[0].mxu0
    %v792 = vadd.f32 0.0, %v791
    %v793 = vpop.f32.mrb[0].mxu0
    %v794 = vpop.f32.mrb[0].mxu0
    %v795 = vadd.f32 0.0, %v794
    %v796 = vpop.f32.mrb[0].mxu0
    %797 = vmatprep.mubr.bf16.mxu0 0
    %798 = vmatmul.mubr.bf16.gmra.mrb[0].mxu0 %v463
    %v799 = vpop.f32.mrb[0].mxu0
    %v800 = vadd.f32 0.0, %v799
    %v801 = vpop.f32.mrb[0].mxu0
    %v802 = vpop.f32.mrb[0].mxu0
    %v803 = vadd.f32 0.0, %v802
    %v804 = vpop.f32.mrb[0].mxu0
    %805 = vmatprep.mubr.bf16.mxu0 0
    %806 = vmatmul.mubr.bf16.gmra.mrb[0].mxu0 %v464
    %v807 = vpop.f32.mrb[0].mxu0
    %v808 = vadd.f32 0.0, %v807
    %v809 = vpop.f32.mrb[0].mxu0
    %v810 = vpop.f32.mrb[0].mxu0
    %v811 = vadd.f32 0.0, %v810
    %v812 = vpop.f32.mrb[0].mxu0
    %813 = vmatprep.mubr.bf16.mxu0 0
    %814 = vmatmul.mubr.bf16.gmra.mrb[0].mxu0 %v465
    %v815 = vpop.f32.mrb[0].mxu0
    %v816 = vadd.f32 0.0, %v815
    %v817 = vpop.f32.mrb[0].mxu0
    %v818 = vpop.f32.mrb[0].mxu0
    %v819 = vadd.f32 0.0, %v818
    %v820 = vpop.f32.mrb[0].mxu0
    %821 = vmatprep.mubr.bf16.mxu0 0
    %822 = vmatmul.mubr.bf16.gmra.mrb[0].mxu0 %v466
    %v823 = vpop.f32.mrb[0].mxu0
    %v824 = vadd.f32 0.0, %v823
    %v825 = vpop.f32.mrb[0].mxu0
    %v826 = vpop.f32.mrb[0].mxu0
    %v827 = vadd.f32 0.0, %v826
    %v828 = vpop.f32.mrb[0].mxu0
    %829 = vmatprep.mubr.bf16.mxu0 0
    %830 = vmatmul.mubr.bf16.gmra.mrb[0].mxu0 %v467
    %v831 = vpop.f32.mrb[0].mxu0
    %v832 = vadd.f32 0.0, %v831
    %v833 = vpop.f32.mrb[0].mxu0
    %v834 = vpop.f32.mrb[0].mxu0
    %v835 = vadd.f32 0.0, %v834
    %v836 = vpop.f32.mrb[0].mxu0
    %837 = vmatprep.mubr.bf16.mxu0 0
    %838 = vmatmul.mubr.bf16.gmra.mrb[0].mxu0 %v468
    %v839 = vpop.f32.mrb[0].mxu0
    %v840 = vadd.f32 0.0, %v839
    %v841 = vpop.f32.mrb[0].mxu0
    %v842 = vpop.f32.mrb[0].mxu0
    %v843 = vadd.f32 0.0, %v842
    %v844 = vpop.f32.mrb[0].mxu0
    %845 = vmatprep.mubr.bf16.mxu0 0
    %846 = vmatmul.mubr.bf16.gmra.mrb[0].mxu0 %v469
    %v847 = vpop.f32.mrb[0].mxu0
    %v848 = vadd.f32 0.0, %v847
    %v849 = vpop.f32.mrb[0].mxu0
    %v850 = vpop.f32.mrb[0].mxu0
    %v851 = vadd.f32 0.0, %v850
    %v852 = vpop.f32.mrb[0].mxu0
    %853 = vmatprep.mubr.bf16.mxu0 0
    %854 = vmatmul.mubr.bf16.gmra.mrb[0].mxu0 %v470
    %v855 = vpop.f32.mrb[0].mxu0
    %v856 = vadd.f32 0.0, %v855
    %v857 = vpop.f32.mrb[0].mxu0
    %v858 = vpop.f32.mrb[0].mxu0
    %v859 = vadd.f32 0.0, %v858
    %v860 = vpop.f32.mrb[0].mxu0
    %861 = vmatprep.mubr.bf16.mxu0 0
    %862 = vmatmul.mubr.bf16.gmra.mrb[0].mxu0 %v471
    %v863 = vpop.f32.mrb[0].mxu0
    %v864 = vadd.f32 0.0, %v863
    %v865 = vpop.f32.mrb[0].mxu0
    %v866 = vpop.f32.mrb[0].mxu0
    %v867 = vadd.f32 0.0, %v866
    %v868 = vpop.f32.mrb[0].mxu0
    %869 = vmatprep.mubr.bf16.mxu0 0
    %870 = vmatmul.mubr.bf16.gmra.mrb[0].mxu0 %v472
    %v871 = vpop.f32.mrb[0].mxu0
    %v872 = vadd.f32 0.0, %v871
    %v873 = vpop.f32.mrb[0].mxu0
    %v874 = vpop.f32.mrb[0].mxu0
    %v875 = vadd.f32 0.0, %v874
    %v876 = vpop.f32.mrb[0].mxu0
    %877 = vmatprep.mubr.bf16.mxu0 0
    %878 = vmatmul.mubr.bf16.gmra.mrb[0].mxu0 %v473
    %v879 = vpop.f32.mrb[0].mxu0
    %v880 = vadd.f32 0.0, %v879
    %v881 = vpop.f32.mrb[0].mxu0
    %v882 = vpop.f32.mrb[0].mxu0
    %v883 = vadd.f32 0.0, %v882
    %v884 = vpop.f32.mrb[0].mxu0
    %885 = vmatprep.mubr.bf16.mxu0 0
    %886 = vmatmul.mubr.bf16.gmra.mrb[0].mxu0 %v474
    %v887 = vpop.f32.mrb[0].mxu0
    %v888 = vadd.f32 0.0, %v887
    %v889 = vpop.f32.mrb[0].mxu0
    %v890 = vpop.f32.mrb[0].mxu0
    %v891 = vadd.f32 0.0, %v890
    %v892 = vpop.f32.mrb[0].mxu0
    %893 = vmatprep.mubr.bf16.mxu0 0
    %894 = vmatmul.mubr.bf16.gmra.mrb[0].mxu0 %v475
    %v895 = vpop.f32.mrb[0].mxu0
    %v896 = vadd.f32 0.0, %v895
    %v897 = vpop.f32.mrb[0].mxu0
    %v898 = vpop.f32.mrb[0].mxu0
    %v899 = vadd.f32 0.0, %v898
    %v900 = vpop.f32.mrb[0].mxu0
    %901 = vmatprep.mubr.bf16.mxu0 0
    %902 = vmatmul.mubr.bf16.gmra.mrb[0].mxu0 %v476
    %v903 = vpop.f32.mrb[0].mxu0
    %v904 = vadd.f32 0.0, %v903
    %v905 = vpop.f32.mrb[0].mxu0
    %v906 = vpop.f32.mrb[0].mxu0
    %v907 = vadd.f32 0.0, %v906
    %v908 = vpop.f32.mrb[0].mxu0
    %909 = vmatprep.mubr.bf16.mxu0 0
    %910 = vmatmul.mubr.bf16.gmra.mrb[0].mxu0 %v477
    %v911 = vpop.f32.mrb[0].mxu0
    %v912 = vadd.f32 0.0, %v911
    %v913 = vpop.f32.mrb[0].mxu0
    %v914 = vpop.f32.mrb[0].mxu0
    %v915 = vadd.f32 0.0, %v914
    %v916 = vpop.f32.mrb[0].mxu0
    %917 = vmatprep.mubr.bf16.mxu0 0
    %918 = vmatmul.mubr.bf16.gmra.mrb[0].mxu0 %v478
    %v919 = vpop.f32.mrb[0].mxu0
    %v920 = vadd.f32 0.0, %v919
    %v921 = vpop.f32.mrb[0].mxu0
    %v922 = vpop.f32.mrb[0].mxu0
    %v923 = vadd.f32 0.0, %v922
    %v924 = vpop.f32.mrb[0].mxu0
    %925 = vmatprep.mubr.bf16.mxu0 0
    %926 = vmatmul.mubr.bf16.gmra.mrb[0].mxu0 %v479
    %v927 = vpop.f32.mrb[0].mxu0
    %v928 = vadd.f32 0.0, %v927
    %v929 = vpop.f32.mrb[0].mxu0
    %v930 = vpop.f32.mrb[0].mxu0
    %v931 = vadd.f32 0.0, %v930
    %v932 = vpop.f32.mrb[0].mxu0
    %933 = vmatprep.mubr.bf16.mxu0 0
    %934 = vmatmul.mubr.bf16.gmra.mrb[0].mxu0 %v480
    %v935 = vpop.f32.mrb[0].mxu0
    %v936 = vadd.f32 0.0, %v935
    %v937 = vpop.f32.mrb[0].mxu0
    %v938 = vpop.f32.mrb[0].mxu0
    %v939 = vadd.f32 0.0, %v938
    %v940 = vpop.f32.mrb[0].mxu0
    %941 = vmatprep.mubr.bf16.mxu0 0
    %942 = vmatmul.mubr.bf16.gmra.mrb[0].mxu0 %v481
    %v943 = vpop.f32.mrb[0].mxu0
    %v944 = vadd.f32 0.0, %v943
    %v945 = vpop.f32.mrb[0].mxu0
    %v946 = vpop.f32.mrb[0].mxu0
    %v947 = vadd.f32 0.0, %v946
    %v948 = vpop.f32.mrb[0].mxu0
    %949 = vmatprep.mubr.bf16.mxu0 0
    %950 = vmatmul.mubr.bf16.gmra.mrb[0].mxu0 %v482
    %v951 = vpop.f32.mrb[0].mxu0
    %v952 = vadd.f32 0.0, %v951
    %v953 = vpop.f32.mrb[0].mxu0
    %v954 = vpop.f32.mrb[0].mxu0
    %v955 = vadd.f32 0.0, %v954
    %v956 = vpop.f32.mrb[0].mxu0
    %957 = vmatprep.mubr.bf16.mxu0 0
    %958 = vmatmul.mubr.bf16.gmra.mrb[0].mxu0 %v483
    %v959 = vpop.f32.mrb[0].mxu0
    %v960 = vadd.f32 0.0, %v959
    %v961 = vpop.f32.mrb[0].mxu0
    %v962 = vpop.f32.mrb[0].mxu0
    %v963 = vadd.f32 0.0, %v962
    %v964 = vpop.f32.mrb[0].mxu0
    %965 = vmatprep.mubr.bf16.mxu0 0
    %966 = vmatmul.mubr.bf16.gmra.mrb[0].mxu0 %v484
    %v967 = vpop.f32.mrb[0].mxu0
    %v968 = vadd.f32 0.0, %v967
    %v969 = vpop.f32.mrb[0].mxu0
    %v970 = vpop.f32.mrb[0].mxu0
    %v971 = vadd.f32 0.0, %v970
    %v972 = vpop.f32.mrb[0].mxu0
    %973 = vmatprep.mubr.bf16.mxu0 0
    %974 = vmatmul.mubr.bf16.gmra.mrb[0].mxu0 %v485
    %v975 = vpop.f32.mrb[0].mxu0
    %v976 = vadd.f32 0.0, %v975
    %v977 = vpop.f32.mrb[0].mxu0
    %v978 = vpop.f32.mrb[0].mxu0
    %v979 = vadd.f32 0.0, %v978
    %v980 = vpop.f32.mrb[0].mxu0
    %981 = vmatprep.mubr.bf16.mxu0 0
    %982 = vmatmul.mubr.bf16.gmra.mrb[0].mxu0 %v486
    %v983 = vpop.f32.mrb[0].mxu0
    %v984 = vadd.f32 0.0, %v983
    %v985 = vpop.f32.mrb[0].mxu0
    %v986 = vpop.f32.mrb[0].mxu0
    %v987 = vadd.f32 0.0, %v986
    %v988 = vpop.f32.mrb[0].mxu0
    %989 = vmatprep.mubr.bf16.mxu0 0
    %990 = vmatmul.mubr.bf16.gmra.mrb[0].mxu0 %v487
    %v991 = vpop.f32.mrb[0].mxu0
    %v992 = vadd.f32 0.0, %v991
    %v993 = vpop.f32.mrb[0].mxu0
    %v994 = vpop.f32.mrb[0].mxu0
    %v995 = vadd.f32 0.0, %v994
    %v996 = vpop.f32.mrb[0].mxu0
    %997 = vmatprep.mubr.bf16.mxu0 0
    %998 = vmatmul.mubr.bf16.gmra.mrb[0].mxu0 %v488
    %v999 = vpop.f32.mrb[0].mxu0
    %v1000 = vadd.f32 0.0, %v999
    %v1001 = vpop.f32.mrb[0].mxu0
    %v1002 = vpop.f32.mrb[0].mxu0
    %v1003 = vadd.f32 0.0, %v1002
    %v1004 = vpop.f32.mrb[0].mxu0
    %1005 = vmatprep.mubr.bf16.mxu0 0
    %1006 = vmatmul.mubr.bf16.gmra.mrb[0].mxu0 %v489
    %v1007 = vpop.f32.mrb[0].mxu0
    %v1008 = vadd.f32 0.0, %v1007
    %v1009 = vpop.f32.mrb[0].mxu0
    %v1010 = vpop.f32.mrb[0].mxu0
    %v1011 = vadd.f32 0.0, %v1010
    %v1012 = vpop.f32.mrb[0].mxu0
    %1013 = vmatprep.mubr.bf16.mxu0 0
    %1014 = vmatmul.mubr.bf16.gmra.mrb[0].mxu0 %v490
    %v1015 = vpop.f32.mrb[0].mxu0
    %v1016 = vadd.f32 0.0, %v1015
    %v1017 = vpop.f32.mrb[0].mxu0
    %v1018 = vpop.f32.mrb[0].mxu0
    %v1019 = vadd.f32 0.0, %v1018
    %v1020 = vpop.f32.mrb[0].mxu0
    %1021 = vmatprep.mubr.bf16.mxu0 0
    %1022 = vmatmul.mubr.bf16.gmra.mrb[0].mxu0 %v491
    %v1023 = vpop.f32.mrb[0].mxu0
    %v1024 = vadd.f32 0.0, %v1023
    %v1025 = vpop.f32.mrb[0].mxu0
    %v1026 = vpop.f32.mrb[0].mxu0
    %v1027 = vadd.f32 0.0, %v1026
    %v1028 = vpop.f32.mrb[0].mxu0
    %1029 = vmatprep.mubr.bf16.mxu0 0
    %1030 = vmatmul.mubr.bf16.gmra.mrb[0].mxu0 %v492
    %v1031 = vpop.f32.mrb[0].mxu0
    %v1032 = vadd.f32 0.0, %v1031
    %v1033 = vpop.f32.mrb[0].mxu0
    %v1034 = vpop.f32.mrb[0].mxu0
    %v1035 = vadd.f32 0.0, %v1034
    %v1036 = vpop.f32.mrb[0].mxu0
    %1037 = vmatprep.mubr.bf16.mxu0 0
    %1038 = vmatmul.mubr.bf16.gmra.mrb[0].mxu0 %v493
    %v1039 = vpop.f32.mrb[0].mxu0
    %v1040 = vadd.f32 0.0, %v1039
    %v1041 = vpop.f32.mrb[0].mxu0
    %v1042 = vpop.f32.mrb[0].mxu0
    %v1043 = vadd.f32 0.0, %v1042
    %v1044 = vpop.f32.mrb[0].mxu0
    %1045 = vmatprep.mubr.bf16.mxu0 0
    %1046 = vmatmul.mubr.bf16.gmra.mrb[0].mxu0 %v494
    %v1047 = vpop.f32.mrb[0].mxu0
    %v1048 = vadd.f32 0.0, %v1047
    %v1049 = vpop.f32.mrb[0].mxu0
    %v1050 = vpop.f32.mrb[0].mxu0
    %v1051 = vadd.f32 0.0, %v1050
    %v1052 = vpop.f32.mrb[0].mxu0
    %1053 = vmatprep.mubr.bf16.mxu0 0
    %1054 = vmatmul.mubr.bf16.gmra.mrb[0].mxu0 %v495
    %v1055 = vpop.f32.mrb[0].mxu0
    %v1056 = vadd.f32 0.0, %v1055
    %v1057 = vpop.f32.mrb[0].mxu0
    %v1058 = vpop.f32.mrb[0].mxu0
    %v1059 = vadd.f32 0.0, %v1058
    %v1060 = vpop.f32.mrb[0].mxu0
    %1061 = vmatprep.mubr.bf16.mxu0 0
    %1062 = vmatmul.mubr.bf16.gmra.mrb[0].mxu0 %v496
    %v1063 = vpop.f32.mrb[0].mxu0
    %v1064 = vadd.f32 0.0, %v1063
    %v1065 = vpop.f32.mrb[0].mxu0
    %v1066 = vpop.f32.mrb[0].mxu0
    %v1067 = vadd.f32 0.0, %v1066
    %v1068 = vpop.f32.mrb[0].mxu0
    %1069 = vmatprep.mubr.bf16.mxu0 0
    %1070 = vmatmul.mubr.bf16.gmra.mrb[0].mxu0 %v497
    %v1071 = vpop.f32.mrb[0].mxu0
    %v1072 = vadd.f32 0.0, %v1071
    %v1073 = vpop.f32.mrb[0].mxu0
    %v1074 = vpop.f32.mrb[0].mxu0
    %v1075 = vadd.f32 0.0, %v1074
    %v1076 = vpop.f32.mrb[0].mxu0
    %1077 = vmatprep.mubr.bf16.mxu0 0
    %1078 = vmatmul.mubr.bf16.gmra.mrb[0].mxu0 %v498
    %v1079 = vpop.f32.mrb[0].mxu0
    %v1080 = vadd.f32 0.0, %v1079
    %v1081 = vpop.f32.mrb[0].mxu0
    %v1082 = vpop.f32.mrb[0].mxu0
    %v1083 = vadd.f32 0.0, %v1082
    %v1084 = vpop.f32.mrb[0].mxu0
    %1085 = vmatprep.mubr.bf16.mxu0 0
    %1086 = vmatmul.mubr.bf16.gmra.mrb[0].mxu0 %v499
    %v1087 = vpop.f32.mrb[0].mxu0
    %v1088 = vadd.f32 0.0, %v1087
    %v1089 = vpop.f32.mrb[0].mxu0
    %v1090 = vpop.f32.mrb[0].mxu0
    %v1091 = vadd.f32 0.0, %v1090
    %v1092 = vpop.f32.mrb[0].mxu0
    %1093 = vmatprep.mubr.bf16.mxu0 0
    %1094 = vmatmul.mubr.bf16.gmra.mrb[0].mxu0 %v500
    %v1095 = vpop.f32.mrb[0].mxu0
    %v1096 = vadd.f32 0.0, %v1095
    %v1097 = vpop.f32.mrb[0].mxu0
    %v1098 = vpop.f32.mrb[0].mxu0
    %v1099 = vadd.f32 0.0, %v1098
    %v1100 = vpop.f32.mrb[0].mxu0
    %1101 = vmatprep.mubr.bf16.mxu0 0
    %1102 = vmatmul.mubr.bf16.gmra.mrb[0].mxu0 %v501
    %v1103 = vpop.f32.mrb[0].mxu0
    %v1104 = vadd.f32 0.0, %v1103
    %v1105 = vpop.f32.mrb[0].mxu0
    %v1106 = vpop.f32.mrb[0].mxu0
    %v1107 = vadd.f32 0.0, %v1106
    %v1108 = vpop.f32.mrb[0].mxu0
    %1109 = vmatprep.mubr.bf16.mxu0 0
    %1110 = vmatmul.mubr.bf16.gmra.mrb[0].mxu0 %v502
    %v1111 = vpop.f32.mrb[0].mxu0
    %v1112 = vadd.f32 0.0, %v1111
    %v1113 = vpop.f32.mrb[0].mxu0
    %v1114 = vpop.f32.mrb[0].mxu0
    %v1115 = vadd.f32 0.0, %v1114
    %v1116 = vpop.f32.mrb[0].mxu0
    %1117 = vmatprep.mubr.bf16.mxu0 0
    %1118 = vmatmul.mubr.bf16.gmra.mrb[0].mxu0 %v503
    %v1119 = vpop.f32.mrb[0].mxu0
    %v1120 = vadd.f32 0.0, %v1119
    %v1121 = vpop.f32.mrb[0].mxu0
    %v1122 = vpop.f32.mrb[0].mxu0
    %v1123 = vadd.f32 0.0, %v1122
    %v1124 = vpop.f32.mrb[0].mxu0
    %1125 = vmatprep.mubr.bf16.mxu0 0
    %1126 = vmatmul.mubr.bf16.gmra.mrb[0].mxu0 %v504
    %v1127 = vpop.f32.mrb[0].mxu0
    %v1128 = vadd.f32 0.0, %v1127
    %v1129 = vpop.f32.mrb[0].mxu0
    %v1130 = vpop.f32.mrb[0].mxu0
    %v1131 = vadd.f32 0.0, %v1130
    %v1132 = vpop.f32.mrb[0].mxu0
    %1133 = vmatprep.mubr.bf16.mxu0 0
    %1134 = vmatmul.mubr.bf16.gmra.mrb[0].mxu0 %v505
    %v1135 = vpop.f32.mrb[0].mxu0
    %v1136 = vadd.f32 0.0, %v1135
    %v1137 = vpop.f32.mrb[0].mxu0
    %v1138 = vpop.f32.mrb[0].mxu0
    %v1139 = vadd.f32 0.0, %v1138
    %v1140 = vpop.f32.mrb[0].mxu0
    %1141 = vmatprep.mubr.bf16.mxu0 0
    %1142 = vmatmul.mubr.bf16.gmra.mrb[0].mxu0 %v506
    %v1143 = vpop.f32.mrb[0].mxu0
    %v1144 = vadd.f32 0.0, %v1143
    %v1145 = vpop.f32.mrb[0].mxu0
    %v1146 = vpop.f32.mrb[0].mxu0
    %v1147 = vadd.f32 0.0, %v1146
    %v1148 = vpop.f32.mrb[0].mxu0
    %1149 = vmatprep.mubr.bf16.mxu0 0
    %1150 = vmatmul.mubr.bf16.gmra.mrb[0].mxu0 %v507
    %v1151 = vpop.f32.mrb[0].mxu0
    %v1152 = vadd.f32 0.0, %v1151
    %v1153 = vpop.f32.mrb[0].mxu0
    %v1154 = vpop.f32.mrb[0].mxu0
    %v1155 = vadd.f32 0.0, %v1154
    %v1156 = vpop.f32.mrb[0].mxu0
    %1157 = vmatprep.mubr.bf16.mxu0 0
    %1158 = vmatmul.mubr.bf16.gmra.mrb[0].mxu0 %v508
    %v1159 = vpop.f32.mrb[0].mxu0
    %v1160 = vadd.f32 0.0, %v1159
    %v1161 = vpop.f32.mrb[0].mxu0
    %v1162 = vpop.f32.mrb[0].mxu0
    %v1163 = vadd.f32 0.0, %v1162
    %v1164 = vpop.f32.mrb[0].mxu0
    %1165 = vdwg.mxu0
    %v1166 = vpack.c.bf16 %v659, %v656
    %v1167 = vpack.c.bf16 %v667, %v664
    %v1168 = vpack.c.bf16 %v675, %v672
    %v1169 = vpack.c.bf16 %v683, %v680
    %v1170 = vpack.c.bf16 %v691, %v688
    %v1171 = vpack.c.bf16 %v699, %v696
    %v1172 = vpack.c.bf16 %v707, %v704
    %v1173 = vpack.c.bf16 %v715, %v712
    %v1174 = vpack.c.bf16 %v723, %v720
    %v1175 = vpack.c.bf16 %v731, %v728
    %v1176 = vpack.c.bf16 %v739, %v736
    %v1177 = vpack.c.bf16 %v747, %v744
    %v1178 = vpack.c.bf16 %v755, %v752
    %v1179 = vpack.c.bf16 %v763, %v760
    %v1180 = vpack.c.bf16 %v771, %v768
    %v1181 = vpack.c.bf16 %v779, %v776
    %v1182 = vpack.c.bf16 %v787, %v784
    %v1183 = vpack.c.bf16 %v795, %v792
    %v1184 = vpack.c.bf16 %v803, %v800
    %v1185 = vpack.c.bf16 %v811, %v808
    %v1186 = vpack.c.bf16 %v819, %v816
    %v1187 = vpack.c.bf16 %v827, %v824
    %v1188 = vpack.c.bf16 %v835, %v832
    %v1189 = vpack.c.bf16 %v843, %v840
    %v1190 = vpack.c.bf16 %v851, %v848
    %v1191 = vpack.c.bf16 %v859, %v856
    %v1192 = vpack.c.bf16 %v867, %v864
    %v1193 = vpack.c.bf16 %v875, %v872
    %v1194 = vpack.c.bf16 %v883, %v880
    %v1195 = vpack.c.bf16 %v891, %v888
    %v1196 = vpack.c.bf16 %v899, %v896
    %v1197 = vpack.c.bf16 %v907, %v904
    %v1198 = vpack.c.bf16 %v915, %v912
    %v1199 = vpack.c.bf16 %v923, %v920
    %v1200 = vpack.c.bf16 %v931, %v928
    %v1201 = vpack.c.bf16 %v939, %v936
    %v1202 = vpack.c.bf16 %v947, %v944
    %v1203 = vpack.c.bf16 %v955, %v952
    %v1204 = vpack.c.bf16 %v963, %v960
    %v1205 = vpack.c.bf16 %v971, %v968
    %v1206 = vpack.c.bf16 %v979, %v976
    %v1207 = vpack.c.bf16 %v987, %v984
    %v1208 = vpack.c.bf16 %v995, %v992
    %v1209 = vpack.c.bf16 %v1003, %v1000
    %v1210 = vpack.c.bf16 %v1011, %v1008
    %v1211 = vpack.c.bf16 %v1019, %v1016
    %v1212 = vpack.c.bf16 %v1027, %v1024
    %v1213 = vpack.c.bf16 %v1035, %v1032
    %v1214 = vpack.c.bf16 %v1043, %v1040
    %v1215 = vpack.c.bf16 %v1051, %v1048
    %v1216 = vpack.c.bf16 %v1059, %v1056
    %v1217 = vpack.c.bf16 %v1067, %v1064
    %v1218 = vpack.c.bf16 %v1075, %v1072
    %v1219 = vpack.c.bf16 %v1083, %v1080
    %v1220 = vpack.c.bf16 %v1091, %v1088
    %v1221 = vpack.c.bf16 %v1099, %v1096
    %v1222 = vpack.c.bf16 %v1107, %v1104
    %v1223 = vpack.c.bf16 %v1115, %v1112
    %v1224 = vpack.c.bf16 %v1123, %v1120
    %v1225 = vpack.c.bf16 %v1131, %v1128
    %v1226 = vpack.c.bf16 %v1139, %v1136
    %v1227 = vpack.c.bf16 %v1147, %v1144
    %v1228 = vpack.c.bf16 %v1155, %v1152
    %v1229 = vpack.c.bf16 %v1163, %v1160
    %v1294 = vunpack.c.l.b16 %v1166
    %v1295 = vunpack.c.h.b16 %v1166
    %v1296 = vunpack.c.l.b16 %v1167
    %v1297 = vunpack.c.h.b16 %v1167
    %v1298 = vunpack.c.l.b16 %v1168
    %v1299 = vunpack.c.h.b16 %v1168
    %v1300 = vunpack.c.l.b16 %v1169
    %v1301 = vunpack.c.h.b16 %v1169
    %v1302 = vunpack.c.l.b16 %v1170
    %v1303 = vunpack.c.h.b16 %v1170
    %v1304 = vunpack.c.l.b16 %v1171
    %v1305 = vunpack.c.h.b16 %v1171
    %v1306 = vunpack.c.l.b16 %v1172
    %v1307 = vunpack.c.h.b16 %v1172
    %v1308 = vunpack.c.l.b16 %v1173
    %v1309 = vunpack.c.h.b16 %v1173
    %v1310 = vunpack.c.l.b16 %v1174
    %v1311 = vunpack.c.h.b16 %v1174
    %v1312 = vunpack.c.l.b16 %v1175
    %v1313 = vunpack.c.h.b16 %v1175
    %v1314 = vunpack.c.l.b16 %v1176
    %v1315 = vunpack.c.h.b16 %v1176
    %v1316 = vunpack.c.l.b16 %v1177
    %v1317 = vunpack.c.h.b16 %v1177
    %v1318 = vunpack.c.l.b16 %v1178
    %v1319 = vunpack.c.h.b16 %v1178
    %v1320 = vunpack.c.l.b16 %v1179
    %v1321 = vunpack.c.h.b16 %v1179
    %v1322 = vunpack.c.l.b16 %v1180
    %v1323 = vunpack.c.h.b16 %v1180
    %v1324 = vunpack.c.l.b16 %v1181
    %v1325 = vunpack.c.h.b16 %v1181
    %v1326 = vunpack.c.l.b16 %v1182
    %v1327 = vunpack.c.h.b16 %v1182
    %v1328 = vunpack.c.l.b16 %v1183
    %v1329 = vunpack.c.h.b16 %v1183
    %v1330 = vunpack.c.l.b16 %v1184
    %v1331 = vunpack.c.h.b16 %v1184
    %v1332 = vunpack.c.l.b16 %v1185
    %v1333 = vunpack.c.h.b16 %v1185
    %v1334 = vunpack.c.l.b16 %v1186
    %v1335 = vunpack.c.h.b16 %v1186
    %v1336 = vunpack.c.l.b16 %v1187
    %v1337 = vunpack.c.h.b16 %v1187
    %v1338 = vunpack.c.l.b16 %v1188
    %v1339 = vunpack.c.h.b16 %v1188
    %v1340 = vunpack.c.l.b16 %v1189
    %v1341 = vunpack.c.h.b16 %v1189
    %v1342 = vunpack.c.l.b16 %v1190
    %v1343 = vunpack.c.h.b16 %v1190
    %v1344 = vunpack.c.l.b16 %v1191
    %v1345 = vunpack.c.h.b16 %v1191
    %v1346 = vunpack.c.l.b16 %v1192
    %v1347 = vunpack.c.h.b16 %v1192
    %v1348 = vunpack.c.l.b16 %v1193
    %v1349 = vunpack.c.h.b16 %v1193
    %v1350 = vunpack.c.l.b16 %v1194
    %v1351 = vunpack.c.h.b16 %v1194
    %v1352 = vunpack.c.l.b16 %v1195
    %v1353 = vunpack.c.h.b16 %v1195
    %v1354 = vunpack.c.l.b16 %v1196
    %v1355 = vunpack.c.h.b16 %v1196
    %v1356 = vunpack.c.l.b16 %v1197
    %v1357 = vunpack.c.h.b16 %v1197
    %v1358 = vunpack.c.l.b16 %v1198
    %v1359 = vunpack.c.h.b16 %v1198
    %v1360 = vunpack.c.l.b16 %v1199
    %v1361 = vunpack.c.h.b16 %v1199
    %v1362 = vunpack.c.l.b16 %v1200
    %v1363 = vunpack.c.h.b16 %v1200
    %v1364 = vunpack.c.l.b16 %v1201
    %v1365 = vunpack.c.h.b16 %v1201
    %v1366 = vunpack.c.l.b16 %v1202
    %v1367 = vunpack.c.h.b16 %v1202
    %v1368 = vunpack.c.l.b16 %v1203
    %v1369 = vunpack.c.h.b16 %v1203
    %v1370 = vunpack.c.l.b16 %v1204
    %v1371 = vunpack.c.h.b16 %v1204
    %v1372 = vunpack.c.l.b16 %v1205
    %v1373 = vunpack.c.h.b16 %v1205
    %v1374 = vunpack.c.l.b16 %v1206
    %v1375 = vunpack.c.h.b16 %v1206
    %v1376 = vunpack.c.l.b16 %v1207
    %v1377 = vunpack.c.h.b16 %v1207
    %v1378 = vunpack.c.l.b16 %v1208
    %v1379 = vunpack.c.h.b16 %v1208
    %v1380 = vunpack.c.l.b16 %v1209
    %v1381 = vunpack.c.h.b16 %v1209
    %v1382 = vunpack.c.l.b16 %v1210
    %v1383 = vunpack.c.h.b16 %v1210
    %v1384 = vunpack.c.l.b16 %v1211
    %v1385 = vunpack.c.h.b16 %v1211
    %v1386 = vunpack.c.l.b16 %v1212
    %v1387 = vunpack.c.h.b16 %v1212
    %v1388 = vunpack.c.l.b16 %v1213
    %v1389 = vunpack.c.h.b16 %v1213
    %v1390 = vunpack.c.l.b16 %v1214
    %v1391 = vunpack.c.h.b16 %v1214
    %v1392 = vunpack.c.l.b16 %v1215
    %v1393 = vunpack.c.h.b16 %v1215
    %v1394 = vunpack.c.l.b16 %v1216
    %v1395 = vunpack.c.h.b16 %v1216
    %v1396 = vunpack.c.l.b16 %v1217
    %v1397 = vunpack.c.h.b16 %v1217
    %v1398 = vunpack.c.l.b16 %v1218
    %v1399 = vunpack.c.h.b16 %v1218
    %v1400 = vunpack.c.l.b16 %v1219
    %v1401 = vunpack.c.h.b16 %v1219
    %v1402 = vunpack.c.l.b16 %v1220
    %v1403 = vunpack.c.h.b16 %v1220
    %v1404 = vunpack.c.l.b16 %v1221
    %v1405 = vunpack.c.h.b16 %v1221
    %v1406 = vunpack.c.l.b16 %v1222
    %v1407 = vunpack.c.h.b16 %v1222
    %v1408 = vunpack.c.l.b16 %v1223
    %v1409 = vunpack.c.h.b16 %v1223
    %v1410 = vunpack.c.l.b16 %v1224
    %v1411 = vunpack.c.h.b16 %v1224
    %v1412 = vunpack.c.l.b16 %v1225
    %v1413 = vunpack.c.h.b16 %v1225
    %v1414 = vunpack.c.l.b16 %v1226
    %v1415 = vunpack.c.h.b16 %v1226
    %v1416 = vunpack.c.l.b16 %v1227
    %v1417 = vunpack.c.h.b16 %v1227
    %v1418 = vunpack.c.l.b16 %v1228
    %v1419 = vunpack.c.h.b16 %v1228
    %v1420 = vunpack.c.l.b16 %v1229
    %v1421 = vunpack.c.h.b16 %v1229
    %v1422 = vpack.c.b16 %v1294, %v1294
    %v1423 = vpack.c.b16 %v1295, %v1295
    %v1424 = vpack.c.b16 %v1296, %v1296
    %v1425 = vpack.c.b16 %v1297, %v1297
    %v1426 = vpack.c.b16 %v1298, %v1298
    %v1427 = vpack.c.b16 %v1299, %v1299
    %v1428 = vpack.c.b16 %v1300, %v1300
    %v1429 = vpack.c.b16 %v1301, %v1301
    %v1430 = vpack.c.b16 %v1302, %v1302
    %v1431 = vpack.c.b16 %v1303, %v1303
    %v1432 = vpack.c.b16 %v1304, %v1304
    %v1433 = vpack.c.b16 %v1305, %v1305
    %v1434 = vpack.c.b16 %v1306, %v1306
    %v1435 = vpack.c.b16 %v1307, %v1307
    %v1436 = vpack.c.b16 %v1308, %v1308
    %v1437 = vpack.c.b16 %v1309, %v1309
    %v1438 = vpack.c.b16 %v1310, %v1310
    %v1439 = vpack.c.b16 %v1311, %v1311
    %v1440 = vpack.c.b16 %v1312, %v1312
    %v1441 = vpack.c.b16 %v1313, %v1313
    %v1442 = vpack.c.b16 %v1314, %v1314
    %v1443 = vpack.c.b16 %v1315, %v1315
    %v1444 = vpack.c.b16 %v1316, %v1316
    %v1445 = vpack.c.b16 %v1317, %v1317
    %v1446 = vpack.c.b16 %v1318, %v1318
    %v1447 = vpack.c.b16 %v1319, %v1319
    %v1448 = vpack.c.b16 %v1320, %v1320
    %v1449 = vpack.c.b16 %v1321, %v1321
    %v1450 = vpack.c.b16 %v1322, %v1322
    %v1451 = vpack.c.b16 %v1323, %v1323
    %v1452 = vpack.c.b16 %v1324, %v1324
    %v1453 = vpack.c.b16 %v1325, %v1325
    %v1454 = vpack.c.b16 %v1326, %v1326
    %v1455 = vpack.c.b16 %v1327, %v1327
    %v1456 = vpack.c.b16 %v1328, %v1328
    %v1457 = vpack.c.b16 %v1329, %v1329
    %v1458 = vpack.c.b16 %v1330, %v1330
    %v1459 = vpack.c.b16 %v1331, %v1331
    %v1460 = vpack.c.b16 %v1332, %v1332
    %v1461 = vpack.c.b16 %v1333, %v1333
    %v1462 = vpack.c.b16 %v1334, %v1334
    %v1463 = vpack.c.b16 %v1335, %v1335
    %v1464 = vpack.c.b16 %v1336, %v1336
    %v1465 = vpack.c.b16 %v1337, %v1337
    %v1466 = vpack.c.b16 %v1338, %v1338
    %v1467 = vpack.c.b16 %v1339, %v1339
    %v1468 = vpack.c.b16 %v1340, %v1340
    %v1469 = vpack.c.b16 %v1341, %v1341
    %v1470 = vpack.c.b16 %v1342, %v1342
    %v1471 = vpack.c.b16 %v1343, %v1343
    %v1472 = vpack.c.b16 %v1344, %v1344
    %v1473 = vpack.c.b16 %v1345, %v1345
    %v1474 = vpack.c.b16 %v1346, %v1346
    %v1475 = vpack.c.b16 %v1347, %v1347
    %v1476 = vpack.c.b16 %v1348, %v1348
    %v1477 = vpack.c.b16 %v1349, %v1349
    %v1478 = vpack.c.b16 %v1350, %v1350
    %v1479 = vpack.c.b16 %v1351, %v1351
    %v1480 = vpack.c.b16 %v1352, %v1352
    %v1481 = vpack.c.b16 %v1353, %v1353
    %v1482 = vpack.c.b16 %v1354, %v1354
    %v1483 = vpack.c.b16 %v1355, %v1355
    %v1484 = vpack.c.b16 %v1356, %v1356
    %v1485 = vpack.c.b16 %v1357, %v1357
    %v1486 = vpack.c.b16 %v1358, %v1358
    %v1487 = vpack.c.b16 %v1359, %v1359
    %v1488 = vpack.c.b16 %v1360, %v1360
    %v1489 = vpack.c.b16 %v1361, %v1361
    %v1490 = vpack.c.b16 %v1362, %v1362
    %v1491 = vpack.c.b16 %v1363, %v1363
    %v1492 = vpack.c.b16 %v1364, %v1364
    %v1493 = vpack.c.b16 %v1365, %v1365
    %v1494 = vpack.c.b16 %v1366, %v1366
    %v1495 = vpack.c.b16 %v1367, %v1367
    %v1496 = vpack.c.b16 %v1368, %v1368
    %v1497 = vpack.c.b16 %v1369, %v1369
    %v1498 = vpack.c.b16 %v1370, %v1370
    %v1499 = vpack.c.b16 %v1371, %v1371
    %v1500 = vpack.c.b16 %v1372, %v1372
    %v1501 = vpack.c.b16 %v1373, %v1373
    %v1502 = vpack.c.b16 %v1374, %v1374
    %v1503 = vpack.c.b16 %v1375, %v1375
    %v1504 = vpack.c.b16 %v1376, %v1376
    %v1505 = vpack.c.b16 %v1377, %v1377
    %v1506 = vpack.c.b16 %v1378, %v1378
    %v1507 = vpack.c.b16 %v1379, %v1379
    %v1508 = vpack.c.b16 %v1380, %v1380
    %v1509 = vpack.c.b16 %v1381, %v1381
    %v1510 = vpack.c.b16 %v1382, %v1382
    %v1511 = vpack.c.b16 %v1383, %v1383
    %v1512 = vpack.c.b16 %v1384, %v1384
    %v1513 = vpack.c.b16 %v1385, %v1385
    %v1514 = vpack.c.b16 %v1386, %v1386
    %v1515 = vpack.c.b16 %v1387, %v1387
    %v1516 = vpack.c.b16 %v1388, %v1388
    %v1517 = vpack.c.b16 %v1389, %v1389
    %v1518 = vpack.c.b16 %v1390, %v1390
    %v1519 = vpack.c.b16 %v1391, %v1391
    %v1520 = vpack.c.b16 %v1392, %v1392
    %v1521 = vpack.c.b16 %v1393, %v1393
    %v1522 = vpack.c.b16 %v1394, %v1394
    %v1523 = vpack.c.b16 %v1395, %v1395
    %v1524 = vpack.c.b16 %v1396, %v1396
    %v1525 = vpack.c.b16 %v1397, %v1397
    %v1526 = vpack.c.b16 %v1398, %v1398
    %v1527 = vpack.c.b16 %v1399, %v1399
    %v1528 = vpack.c.b16 %v1400, %v1400
    %v1529 = vpack.c.b16 %v1401, %v1401
    %v1530 = vpack.c.b16 %v1402, %v1402
    %v1531 = vpack.c.b16 %v1403, %v1403
    %v1532 = vpack.c.b16 %v1404, %v1404
    %v1533 = vpack.c.b16 %v1405, %v1405
    %v1534 = vpack.c.b16 %v1406, %v1406
    %v1535 = vpack.c.b16 %v1407, %v1407
    %v1536 = vpack.c.b16 %v1408, %v1408
    %v1537 = vpack.c.b16 %v1409, %v1409
    %v1538 = vpack.c.b16 %v1410, %v1410
    %v1539 = vpack.c.b16 %v1411, %v1411
    %v1540 = vpack.c.b16 %v1412, %v1412
    %v1541 = vpack.c.b16 %v1413, %v1413
    %v1542 = vpack.c.b16 %v1414, %v1414
    %v1543 = vpack.c.b16 %v1415, %v1415
    %v1544 = vpack.c.b16 %v1416, %v1416
    %v1545 = vpack.c.b16 %v1417, %v1417
    %v1546 = vpack.c.b16 %v1418, %v1418
    %v1547 = vpack.c.b16 %v1419, %v1419
    %v1548 = vpack.c.b16 %v1420, %v1420
    %v1549 = vpack.c.b16 %v1421, %v1421
    %1678 = vst [vmem:[#allocation7] sm:$0xf] %v1422
    %1679 = vst [vmem:[#allocation7 + $0x4] sm:$0xf] %v1423
    %1680 = vst [vmem:[#allocation7 + $0x8] sm:$0xf] %v1424
    %1681 = vst [vmem:[#allocation7 + $0xc] sm:$0xf] %v1425
    %1682 = vst [vmem:[#allocation7 + $0x10] sm:$0xf] %v1426
    %1683 = vst [vmem:[#allocation7 + $0x14] sm:$0xf] %v1427
    %1684 = vst [vmem:[#allocation7 + $0x18] sm:$0xf] %v1428
    %1685 = vst [vmem:[#allocation7 + $0x1c] sm:$0xf] %v1429
    %1686 = vst [vmem:[#allocation7 + $0x20] sm:$0xf] %v1430
    %1687 = vst [vmem:[#allocation7 + $0x24] sm:$0xf] %v1431
    %1688 = vst [vmem:[#allocation7 + $0x28] sm:$0xf] %v1432
    %1689 = vst [vmem:[#allocation7 + $0x2c] sm:$0xf] %v1433
    %1690 = vst [vmem:[#allocation7 + $0x30] sm:$0xf] %v1434
    %1691 = vst [vmem:[#allocation7 + $0x34] sm:$0xf] %v1435
    %1692 = vst [vmem:[#allocation7 + $0x38] sm:$0xf] %v1436
    %1693 = vst [vmem:[#allocation7 + $0x3c] sm:$0xf] %v1437
    %1694 = vst [vmem:[#allocation7 + $0x40] sm:$0xf] %v1438
    %1695 = vst [vmem:[#allocation7 + $0x44] sm:$0xf] %v1439
    %1696 = vst [vmem:[#allocation7 + $0x48] sm:$0xf] %v1440
    %1697 = vst [vmem:[#allocation7 + $0x4c] sm:$0xf] %v1441
    %1698 = vst [vmem:[#allocation7 + $0x50] sm:$0xf] %v1442
    %1699 = vst [vmem:[#allocation7 + $0x54] sm:$0xf] %v1443
    %1700 = vst [vmem:[#allocation7 + $0x58] sm:$0xf] %v1444
    %1701 = vst [vmem:[#allocation7 + $0x5c] sm:$0xf] %v1445
    %1702 = vst [vmem:[#allocation7 + $0x60] sm:$0xf] %v1446
    %1703 = vst [vmem:[#allocation7 + $0x64] sm:$0xf] %v1447
    %1704 = vst [vmem:[#allocation7 + $0x68] sm:$0xf] %v1448
    %1705 = vst [vmem:[#allocation7 + $0x6c] sm:$0xf] %v1449
    %1706 = vst [vmem:[#allocation7 + $0x70] sm:$0xf] %v1450
    %1707 = vst [vmem:[#allocation7 + $0x74] sm:$0xf] %v1451
    %1708 = vst [vmem:[#allocation7 + $0x78] sm:$0xf] %v1452
    %1709 = vst [vmem:[#allocation7 + $0x7c] sm:$0xf] %v1453
    %1710 = vst [vmem:[#allocation7 + $0x80] sm:$0xf] %v1454
    %1711 = vst [vmem:[#allocation7 + $0x84] sm:$0xf] %v1455
    %1712 = vst [vmem:[#allocation7 + $0x88] sm:$0xf] %v1456
    %1713 = vst [vmem:[#allocation7 + $0x8c] sm:$0xf] %v1457
    %1714 = vst [vmem:[#allocation7 + $0x90] sm:$0xf] %v1458
    %1715 = vst [vmem:[#allocation7 + $0x94] sm:$0xf] %v1459
    %1716 = vst [vmem:[#allocation7 + $0x98] sm:$0xf] %v1460
    %1717 = vst [vmem:[#allocation7 + $0x9c] sm:$0xf] %v1461
    %1718 = vst [vmem:[#allocation7 + $0xa0] sm:$0xf] %v1462
    %1719 = vst [vmem:[#allocation7 + $0xa4] sm:$0xf] %v1463
    %1720 = vst [vmem:[#allocation7 + $0xa8] sm:$0xf] %v1464
    %1721 = vst [vmem:[#allocation7 + $0xac] sm:$0xf] %v1465
    %1722 = vst [vmem:[#allocation7 + $0xb0] sm:$0xf] %v1466
    %1723 = vst [vmem:[#allocation7 + $0xb4] sm:$0xf] %v1467
    %1724 = vst [vmem:[#allocation7 + $0xb8] sm:$0xf] %v1468
    %1725 = vst [vmem:[#allocation7 + $0xbc] sm:$0xf] %v1469
    %1726 = vst [vmem:[#allocation7 + $0xc0] sm:$0xf] %v1470
    %1727 = vst [vmem:[#allocation7 + $0xc4] sm:$0xf] %v1471
    %1728 = vst [vmem:[#allocation7 + $0xc8] sm:$0xf] %v1472
    %1729 = vst [vmem:[#allocation7 + $0xcc] sm:$0xf] %v1473
    %1730 = vst [vmem:[#allocation7 + $0xd0] sm:$0xf] %v1474
    %1731 = vst [vmem:[#allocation7 + $0xd4] sm:$0xf] %v1475
    %1732 = vst [vmem:[#allocation7 + $0xd8] sm:$0xf] %v1476
    %1733 = vst [vmem:[#allocation7 + $0xdc] sm:$0xf] %v1477
    %1734 = vst [vmem:[#allocation7 + $0xe0] sm:$0xf] %v1478
    %1735 = vst [vmem:[#allocation7 + $0xe4] sm:$0xf] %v1479
    %1736 = vst [vmem:[#allocation7 + $0xe8] sm:$0xf] %v1480
    %1737 = vst [vmem:[#allocation7 + $0xec] sm:$0xf] %v1481
    %1738 = vst [vmem:[#allocation7 + $0xf0] sm:$0xf] %v1482
    %1739 = vst [vmem:[#allocation7 + $0xf4] sm:$0xf] %v1483
    %1740 = vst [vmem:[#allocation7 + $0xf8] sm:$0xf] %v1484
    %1741 = vst [vmem:[#allocation7 + $0xfc] sm:$0xf] %v1485
    %1742 = vst [vmem:[#allocation7 + $0x100] sm:$0xf] %v1486
    %1743 = vst [vmem:[#allocation7 + $0x104] sm:$0xf] %v1487
    %1744 = vst [vmem:[#allocation7 + $0x108] sm:$0xf] %v1488
    %1745 = vst [vmem:[#allocation7 + $0x10c] sm:$0xf] %v1489
    %1746 = vst [vmem:[#allocation7 + $0x110] sm:$0xf] %v1490
    %1747 = vst [vmem:[#allocation7 + $0x114] sm:$0xf] %v1491
    %1748 = vst [vmem:[#allocation7 + $0x118] sm:$0xf] %v1492
    %1749 = vst [vmem:[#allocation7 + $0x11c] sm:$0xf] %v1493
    %1750 = vst [vmem:[#allocation7 + $0x120] sm:$0xf] %v1494
    %1751 = vst [vmem:[#allocation7 + $0x124] sm:$0xf] %v1495
    %1752 = vst [vmem:[#allocation7 + $0x128] sm:$0xf] %v1496
    %1753 = vst [vmem:[#allocation7 + $0x12c] sm:$0xf] %v1497
    %1754 = vst [vmem:[#allocation7 + $0x130] sm:$0xf] %v1498
    %1755 = vst [vmem:[#allocation7 + $0x134] sm:$0xf] %v1499
    %1756 = vst [vmem:[#allocation7 + $0x138] sm:$0xf] %v1500
    %1757 = vst [vmem:[#allocation7 + $0x13c] sm:$0xf] %v1501
    %1758 = vst [vmem:[#allocation7 + $0x140] sm:$0xf] %v1502
    %1759 = vst [vmem:[#allocation7 + $0x144] sm:$0xf] %v1503
    %1760 = vst [vmem:[#allocation7 + $0x148] sm:$0xf] %v1504
    %1761 = vst [vmem:[#allocation7 + $0x14c] sm:$0xf] %v1505
    %1762 = vst [vmem:[#allocation7 + $0x150] sm:$0xf] %v1506
    %1763 = vst [vmem:[#allocation7 + $0x154] sm:$0xf] %v1507
    %1764 = vst [vmem:[#allocation7 + $0x158] sm:$0xf] %v1508
    %1765 = vst [vmem:[#allocation7 + $0x15c] sm:$0xf] %v1509
    %1766 = vst [vmem:[#allocation7 + $0x160] sm:$0xf] %v1510
    %1767 = vst [vmem:[#allocation7 + $0x164] sm:$0xf] %v1511
    %1768 = vst [vmem:[#allocation7 + $0x168] sm:$0xf] %v1512
    %1769 = vst [vmem:[#allocation7 + $0x16c] sm:$0xf] %v1513
    %1770 = vst [vmem:[#allocation7 + $0x170] sm:$0xf] %v1514
    %1771 = vst [vmem:[#allocation7 + $0x174] sm:$0xf] %v1515
    %1772 = vst [vmem:[#allocation7 + $0x178] sm:$0xf] %v1516
    %1773 = vst [vmem:[#allocation7 + $0x17c] sm:$0xf] %v1517
    %1774 = vst [vmem:[#allocation7 + $0x180] sm:$0xf] %v1518
    %1775 = vst [vmem:[#allocation7 + $0x184] sm:$0xf] %v1519
    %1776 = vst [vmem:[#allocation7 + $0x188] sm:$0xf] %v1520
    %1777 = vst [vmem:[#allocation7 + $0x18c] sm:$0xf] %v1521
    %1778 = vst [vmem:[#allocation7 + $0x190] sm:$0xf] %v1522
    %1779 = vst [vmem:[#allocation7 + $0x194] sm:$0xf] %v1523
    %1780 = vst [vmem:[#allocation7 + $0x198] sm:$0xf] %v1524
    %1781 = vst [vmem:[#allocation7 + $0x19c] sm:$0xf] %v1525
    %1782 = vst [vmem:[#allocation7 + $0x1a0] sm:$0xf] %v1526
    %1783 = vst [vmem:[#allocation7 + $0x1a4] sm:$0xf] %v1527
    %1784 = vst [vmem:[#allocation7 + $0x1a8] sm:$0xf] %v1528
    %1785 = vst [vmem:[#allocation7 + $0x1ac] sm:$0xf] %v1529
    %1786 = vst [vmem:[#allocation7 + $0x1b0] sm:$0xf] %v1530
    %1787 = vst [vmem:[#allocation7 + $0x1b4] sm:$0xf] %v1531
    %1788 = vst [vmem:[#allocation7 + $0x1b8] sm:$0xf] %v1532
    %1789 = vst [vmem:[#allocation7 + $0x1bc] sm:$0xf] %v1533
    %1790 = vst [vmem:[#allocation7 + $0x1c0] sm:$0xf] %v1534
    %1791 = vst [vmem:[#allocation7 + $0x1c4] sm:$0xf] %v1535
    %1792 = vst [vmem:[#allocation7 + $0x1c8] sm:$0xf] %v1536
    %1793 = vst [vmem:[#allocation7 + $0x1cc] sm:$0xf] %v1537
    %1794 = vst [vmem:[#allocation7 + $0x1d0] sm:$0xf] %v1538
    %1795 = vst [vmem:[#allocation7 + $0x1d4] sm:$0xf] %v1539
    %1796 = vst [vmem:[#allocation7 + $0x1d8] sm:$0xf] %v1540
    %1797 = vst [vmem:[#allocation7 + $0x1dc] sm:$0xf] %v1541
    %1798 = vst [vmem:[#allocation7 + $0x1e0] sm:$0xf] %v1542
    %1799 = vst [vmem:[#allocation7 + $0x1e4] sm:$0xf] %v1543
    %1800 = vst [vmem:[#allocation7 + $0x1e8] sm:$0xf] %v1544
    %1801 = vst [vmem:[#allocation7 + $0x1ec] sm:$0xf] %v1545
    %1802 = vst [vmem:[#allocation7 + $0x1f0] sm:$0xf] %v1546
    %1803 = vst [vmem:[#allocation7 + $0x1f4] sm:$0xf] %v1547
    %1804 = vst [vmem:[#allocation7 + $0x1f8] sm:$0xf] %v1548
    %1805 = vst [vmem:[#allocation7 + $0x1fc] sm:$0xf] %v1549
    %v1806 = vadd.f32 %v656, %v659
    %v1807 = vadd.f32 %v1806, %v664
    %v1808 = vadd.f32 %v1807, %v667
    %v1809 = vadd.f32 %v1808, %v672
    %v1810 = vadd.f32 %v1809, %v675
    %v1811 = vadd.f32 %v1810, %v680
    %v1812 = vadd.f32 %v1811, %v683
    %v1813 = vadd.f32 %v1812, %v688
    %v1814 = vadd.f32 %v1813, %v691
    %v1815 = vadd.f32 %v1814, %v696
    %v1816 = vadd.f32 %v1815, %v699
    %v1817 = vadd.f32 %v1816, %v704
    %v1818 = vadd.f32 %v1817, %v707
    %v1819 = vadd.f32 %v1818, %v712
    %v1820 = vadd.f32 %v1819, %v715
    %v1821 = vadd.f32 %v1820, %v720
    %v1822 = vadd.f32 %v1821, %v723
    %v1823 = vadd.f32 %v1822, %v728
    %v1824 = vadd.f32 %v1823, %v731
    %v1825 = vadd.f32 %v1824, %v736
    %v1826 = vadd.f32 %v1825, %v739
    %v1827 = vadd.f32 %v1826, %v744
    %v1828 = vadd.f32 %v1827, %v747
    %v1829 = vadd.f32 %v1828, %v752
    %v1830 = vadd.f32 %v1829, %v755
    %v1831 = vadd.f32 %v1830, %v760
    %v1832 = vadd.f32 %v1831, %v763
    %v1833 = vadd.f32 %v1832, %v768
    %v1834 = vadd.f32 %v1833, %v771
    %v1835 = vadd.f32 %v1834, %v776
    %v1836 = vadd.f32 %v1835, %v779
    %v1837 = vadd.f32 %v1836, %v784
    %v1838 = vadd.f32 %v1837, %v787
    %v1839 = vadd.f32 %v1838, %v792
    %v1840 = vadd.f32 %v1839, %v795
    %v1841 = vadd.f32 %v1840, %v800
    %v1842 = vadd.f32 %v1841, %v803
    %v1843 = vadd.f32 %v1842, %v808
    %v1844 = vadd.f32 %v1843, %v811
    %v1845 = vadd.f32 %v1844, %v816
    %v1846 = vadd.f32 %v1845, %v819
    %v1847 = vadd.f32 %v1846, %v824
    %v1848 = vadd.f32 %v1847, %v827
    %v1849 = vadd.f32 %v1848, %v832
    %v1850 = vadd.f32 %v1849, %v835
    %v1851 = vadd.f32 %v1850, %v840
    %v1852 = vadd.f32 %v1851, %v843
    %v1853 = vadd.f32 %v1852, %v848
    %v1854 = vadd.f32 %v1853, %v851
    %v1855 = vadd.f32 %v1854, %v856
    %v1856 = vadd.f32 %v1855, %v859
    %v1857 = vadd.f32 %v1856, %v864
    %v1858 = vadd.f32 %v1857, %v867
    %v1859 = vadd.f32 %v1858, %v872
    %v1860 = vadd.f32 %v1859, %v875
    %v1861 = vadd.f32 %v1860, %v880
    %v1862 = vadd.f32 %v1861, %v883
    %v1863 = vadd.f32 %v1862, %v888
    %v1864 = vadd.f32 %v1863, %v891
    %v1865 = vadd.f32 %v1864, %v896
    %v1866 = vadd.f32 %v1865, %v899
    %v1867 = vadd.f32 %v1866, %v904
    %v1868 = vadd.f32 %v1867, %v907
    %v1869 = vadd.f32 %v1868, %v912
    %v1870 = vadd.f32 %v1869, %v915
    %v1871 = vadd.f32 %v1870, %v920
    %v1872 = vadd.f32 %v1871, %v923
    %v1873 = vadd.f32 %v1872, %v928
    %v1874 = vadd.f32 %v1873, %v931
    %v1875 = vadd.f32 %v1874, %v936
    %v1876 = vadd.f32 %v1875, %v939
    %v1877 = vadd.f32 %v1876, %v944
    %v1878 = vadd.f32 %v1877, %v947
    %v1879 = vadd.f32 %v1878, %v952
    %v1880 = vadd.f32 %v1879, %v955
    %v1881 = vadd.f32 %v1880, %v960
    %v1882 = vadd.f32 %v1881, %v963
    %v1883 = vadd.f32 %v1882, %v968
    %v1884 = vadd.f32 %v1883, %v971
    %v1885 = vadd.f32 %v1884, %v976
    %v1886 = vadd.f32 %v1885, %v979
    %v1887 = vadd.f32 %v1886, %v984
    %v1888 = vadd.f32 %v1887, %v987
    %v1889 = vadd.f32 %v1888, %v992
    %v1890 = vadd.f32 %v1889, %v995
    %v1891 = vadd.f32 %v1890, %v1000
    %v1892 = vadd.f32 %v1891, %v1003
    %v1893 = vadd.f32 %v1892, %v1008
    %v1894 = vadd.f32 %v1893, %v1011
    %v1895 = vadd.f32 %v1894, %v1016
    %v1896 = vadd.f32 %v1895, %v1019
    %v1897 = vadd.f32 %v1896, %v1024
    %v1898 = vadd.f32 %v1897, %v1027
    %v1899 = vadd.f32 %v1898, %v1032
    %v1900 = vadd.f32 %v1899, %v1035
    %v1901 = vadd.f32 %v1900, %v1040
    %v1902 = vadd.f32 %v1901, %v1043
    %v1903 = vadd.f32 %v1902, %v1048
    %v1904 = vadd.f32 %v1903, %v1051
    %v1905 = vadd.f32 %v1904, %v1056
    %v1906 = vadd.f32 %v1905, %v1059
    %v1907 = vadd.f32 %v1906, %v1064
    %v1908 = vadd.f32 %v1907, %v1067
    %v1909 = vadd.f32 %v1908, %v1072
    %v1910 = vadd.f32 %v1909, %v1075
    %v1911 = vadd.f32 %v1910, %v1080
    %v1912 = vadd.f32 %v1911, %v1083
    %v1913 = vadd.f32 %v1912, %v1088
    %v1914 = vadd.f32 %v1913, %v1091
    %v1915 = vadd.f32 %v1914, %v1096
    %v1916 = vadd.f32 %v1915, %v1099
    %v1917 = vadd.f32 %v1916, %v1104
    %v1918 = vadd.f32 %v1917, %v1107
    %v1919 = vadd.f32 %v1918, %v1112
    %v1920 = vadd.f32 %v1919, %v1115
    %v1921 = vadd.f32 %v1920, %v1120
    %v1922 = vadd.f32 %v1921, %v1123
    %v1923 = vadd.f32 %v1922, %v1128
    %v1924 = vadd.f32 %v1923, %v1131
    %v1925 = vadd.f32 %v1924, %v1136
    %v1926 = vadd.f32 %v1925, %v1139
    %v1927 = vadd.f32 %v1926, %v1144
    %v1928 = vadd.f32 %v1927, %v1147
    %v1929 = vadd.f32 %v1928, %v1152
    %v1930 = vadd.f32 %v1929, %v1155
    %v1931 = vadd.f32 %v1930, %v1160
    %v1932 = vadd.f32 %v1931, %v1163
    %v1933 = vrot.slane %v1932, 4
    %v1934 = vadd.f32 %v1932, %v1933
    %v1935 = vrot.slane %v1934, 2
    %v1936 = vadd.f32 %v1934, %v1935
    %v1937 = vrot.slane %v1936, 1
    %v1938 = vadd.f32 %v1936, %v1937
    %1939 = vst [vmem:[#allocation8] sm:$0x1] %v1938
    %v1940 = vmul.f32 %v656, %v656
    %v1941 = vmul.f32 %v659, %v659
    %v1942 = vmul.f32 %v664, %v664
    %v1943 = vmul.f32 %v667, %v667
    %v1944 = vmul.f32 %v672, %v672
    %v1945 = vmul.f32 %v675, %v675
    %v1946 = vmul.f32 %v680, %v680
    %v1947 = vmul.f32 %v683, %v683
    %v1948 = vmul.f32 %v688, %v688
    %v1949 = vmul.f32 %v691, %v691
    %v1950 = vmul.f32 %v696, %v696
    %v1951 = vmul.f32 %v699, %v699
    %v1952 = vmul.f32 %v704, %v704
    %v1953 = vmul.f32 %v707, %v707
    %v1954 = vmul.f32 %v712, %v712
    %v1955 = vmul.f32 %v715, %v715
    %v1956 = vmul.f32 %v720, %v720
    %v1957 = vmul.f32 %v723, %v723
    %v1958 = vmul.f32 %v728, %v728
    %v1959 = vmul.f32 %v731, %v731
    %v1960 = vmul.f32 %v736, %v736
    %v1961 = vmul.f32 %v739, %v739
    %v1962 = vmul.f32 %v744, %v744
    %v1963 = vmul.f32 %v747, %v747
    %v1964 = vmul.f32 %v752, %v752
    %v1965 = vmul.f32 %v755, %v755
    %v1966 = vmul.f32 %v760, %v760
    %v1967 = vmul.f32 %v763, %v763
    %v1968 = vmul.f32 %v768, %v768
    %v1969 = vmul.f32 %v771, %v771
    %v1970 = vmul.f32 %v776, %v776
    %v1971 = vmul.f32 %v779, %v779
    %v1972 = vmul.f32 %v784, %v784
    %v1973 = vmul.f32 %v787, %v787
    %v1974 = vmul.f32 %v792, %v792
    %v1975 = vmul.f32 %v795, %v795
    %v1976 = vmul.f32 %v800, %v800
    %v1977 = vmul.f32 %v803, %v803
    %v1978 = vmul.f32 %v808, %v808
    %v1979 = vmul.f32 %v811, %v811
    %v1980 = vmul.f32 %v816, %v816
    %v1981 = vmul.f32 %v819, %v819
    %v1982 = vmul.f32 %v824, %v824
    %v1983 = vmul.f32 %v827, %v827
    %v1984 = vmul.f32 %v832, %v832
    %v1985 = vmul.f32 %v835, %v835
    %v1986 = vmul.f32 %v840, %v840
    %v1987 = vmul.f32 %v843, %v843
    %v1988 = vmul.f32 %v848, %v848
    %v1989 = vmul.f32 %v851, %v851
    %v1990 = vmul.f32 %v856, %v856
    %v1991 = vmul.f32 %v859, %v859
    %v1992 = vmul.f32 %v864, %v864
    %v1993 = vmul.f32 %v867, %v867
    %v1994 = vmul.f32 %v872, %v872
    %v1995 = vmul.f32 %v875, %v875
    %v1996 = vmul.f32 %v880, %v880
    %v1997 = vmul.f32 %v883, %v883
    %v1998 = vmul.f32 %v888, %v888
    %v1999 = vmul.f32 %v891, %v891
    %v2000 = vmul.f32 %v896, %v896
    %v2001 = vmul.f32 %v899, %v899
    %v2002 = vmul.f32 %v904, %v904
    %v2003 = vmul.f32 %v907, %v907
    %v2004 = vmul.f32 %v912, %v912
    %v2005 = vmul.f32 %v915, %v915
    %v2006 = vmul.f32 %v920, %v920
    %v2007 = vmul.f32 %v923, %v923
    %v2008 = vmul.f32 %v928, %v928
    %v2009 = vmul.f32 %v931, %v931
    %v2010 = vmul.f32 %v936, %v936
    %v2011 = vmul.f32 %v939, %v939
    %v2012 = vmul.f32 %v944, %v944
    %v2013 = vmul.f32 %v947, %v947
    %v2014 = vmul.f32 %v952, %v952
    %v2015 = vmul.f32 %v955, %v955
    %v2016 = vmul.f32 %v960, %v960
    %v2017 = vmul.f32 %v963, %v963
    %v2018 = vmul.f32 %v968, %v968
    %v2019 = vmul.f32 %v971, %v971
    %v2020 = vmul.f32 %v976, %v976
    %v2021 = vmul.f32 %v979, %v979
    %v2022 = vmul.f32 %v984, %v984
    %v2023 = vmul.f32 %v987, %v987
    %v2024 = vmul.f32 %v992, %v992
    %v2025 = vmul.f32 %v995, %v995
    %v2026 = vmul.f32 %v1000, %v1000
    %v2027 = vmul.f32 %v1003, %v1003
    %v2028 = vmul.f32 %v1008, %v1008
    %v2029 = vmul.f32 %v1011, %v1011
    %v2030 = vmul.f32 %v1016, %v1016
    %v2031 = vmul.f32 %v1019, %v1019
    %v2032 = vmul.f32 %v1024, %v1024
    %v2033 = vmul.f32 %v1027, %v1027
    %v2034 = vmul.f32 %v1032, %v1032
    %v2035 = vmul.f32 %v1035, %v1035
    %v2036 = vmul.f32 %v1040, %v1040
    %v2037 = vmul.f32 %v1043, %v1043
    %v2038 = vmul.f32 %v1048, %v1048
    %v2039 = vmul.f32 %v1051, %v1051
    %v2040 = vmul.f32 %v1056, %v1056
    %v2041 = vmul.f32 %v1059, %v1059
    %v2042 = vmul.f32 %v1064, %v1064
    %v2043 = vmul.f32 %v1067, %v1067
    %v2044 = vmul.f32 %v1072, %v1072
    %v2045 = vmul.f32 %v1075, %v1075
    %v2046 = vmul.f32 %v1080, %v1080
    %v2047 = vmul.f32 %v1083, %v1083
    %v2048 = vmul.f32 %v1088, %v1088
    %v2049 = vmul.f32 %v1091, %v1091
    %v2050 = vmul.f32 %v1096, %v1096
    %v2051 = vmul.f32 %v1099, %v1099
    %v2052 = vmul.f32 %v1104, %v1104
    %v2053 = vmul.f32 %v1107, %v1107
    %v2054 = vmul.f32 %v1112, %v1112
    %v2055 = vmul.f32 %v1115, %v1115
    %v2056 = vmul.f32 %v1120, %v1120
    %v2057 = vmul.f32 %v1123, %v1123
    %v2058 = vmul.f32 %v1128, %v1128
    %v2059 = vmul.f32 %v1131, %v1131
    %v2060 = vmul.f32 %v1136, %v1136
    %v2061 = vmul.f32 %v1139, %v1139
    %v2062 = vmul.f32 %v1144, %v1144
    %v2063 = vmul.f32 %v1147, %v1147
    %v2064 = vmul.f32 %v1152, %v1152
    %v2065 = vmul.f32 %v1155, %v1155
    %v2066 = vmul.f32 %v1160, %v1160
    %v2067 = vmul.f32 %v1163, %v1163
    %v2068 = vadd.f32 %v1940, %v1941
    %v2069 = vadd.f32 %v2068, %v1942
    %v2070 = vadd.f32 %v2069, %v1943
    %v2071 = vadd.f32 %v2070, %v1944
    %v2072 = vadd.f32 %v2071, %v1945
    %v2073 = vadd.f32 %v2072, %v1946
    %v2074 = vadd.f32 %v2073, %v1947
    %v2075 = vadd.f32 %v2074, %v1948
    %v2076 = vadd.f32 %v2075, %v1949
    %v2077 = vadd.f32 %v2076, %v1950
    %v2078 = vadd.f32 %v2077, %v1951
    %v2079 = vadd.f32 %v2078, %v1952
    %v2080 = vadd.f32 %v2079, %v1953
    %v2081 = vadd.f32 %v2080, %v1954
    %v2082 = vadd.f32 %v2081, %v1955
    %v2083 = vadd.f32 %v2082, %v1956
    %v2084 = vadd.f32 %v2083, %v1957
    %v2085 = vadd.f32 %v2084, %v1958
    %v2086 = vadd.f32 %v2085, %v1959
    %v2087 = vadd.f32 %v2086, %v1960
    %v2088 = vadd.f32 %v2087, %v1961
    %v2089 = vadd.f32 %v2088, %v1962
    %v2090 = vadd.f32 %v2089, %v1963
    %v2091 = vadd.f32 %v2090, %v1964
    %v2092 = vadd.f32 %v2091, %v1965
    %v2093 = vadd.f32 %v2092, %v1966
    %v2094 = vadd.f32 %v2093, %v1967
    %v2095 = vadd.f32 %v2094, %v1968
    %v2096 = vadd.f32 %v2095, %v1969
    %v2097 = vadd.f32 %v2096, %v1970
    %v2098 = vadd.f32 %v2097, %v1971
    %v2099 = vadd.f32 %v2098, %v1972
    %v2100 = vadd.f32 %v2099, %v1973
    %v2101 = vadd.f32 %v2100, %v1974
    %v2102 = vadd.f32 %v2101, %v1975
    %v2103 = vadd.f32 %v2102, %v1976
    %v2104 = vadd.f32 %v2103, %v1977
    %v2105 = vadd.f32 %v2104, %v1978
    %v2106 = vadd.f32 %v2105, %v1979
    %v2107 = vadd.f32 %v2106, %v1980
    %v2108 = vadd.f32 %v2107, %v1981
    %v2109 = vadd.f32 %v2108, %v1982
    %v2110 = vadd.f32 %v2109, %v1983
    %v2111 = vadd.f32 %v2110, %v1984
    %v2112 = vadd.f32 %v2111, %v1985
    %v2113 = vadd.f32 %v2112, %v1986
    %v2114 = vadd.f32 %v2113, %v1987
    %v2115 = vadd.f32 %v2114, %v1988
    %v2116 = vadd.f32 %v2115, %v1989
    %v2117 = vadd.f32 %v2116, %v1990
    %v2118 = vadd.f32 %v2117, %v1991
    %v2119 = vadd.f32 %v2118, %v1992
    %v2120 = vadd.f32 %v2119, %v1993
    %v2121 = vadd.f32 %v2120, %v1994
    %v2122 = vadd.f32 %v2121, %v1995
    %v2123 = vadd.f32 %v2122, %v1996
    %v2124 = vadd.f32 %v2123, %v1997
    %v2125 = vadd.f32 %v2124, %v1998
    %v2126 = vadd.f32 %v2125, %v1999
    %v2127 = vadd.f32 %v2126, %v2000
    %v2128 = vadd.f32 %v2127, %v2001
    %v2129 = vadd.f32 %v2128, %v2002
    %v2130 = vadd.f32 %v2129, %v2003
    %v2131 = vadd.f32 %v2130, %v2004
    %v2132 = vadd.f32 %v2131, %v2005
    %v2133 = vadd.f32 %v2132, %v2006
    %v2134 = vadd.f32 %v2133, %v2007
    %v2135 = vadd.f32 %v2134, %v2008
    %v2136 = vadd.f32 %v2135, %v2009
    %v2137 = vadd.f32 %v2136, %v2010
    %v2138 = vadd.f32 %v2137, %v2011
    %v2139 = vadd.f32 %v2138, %v2012
    %v2140 = vadd.f32 %v2139, %v2013
    %v2141 = vadd.f32 %v2140, %v2014
    %v2142 = vadd.f32 %v2141, %v2015
    %v2143 = vadd.f32 %v2142, %v2016
    %v2144 = vadd.f32 %v2143, %v2017
    %v2145 = vadd.f32 %v2144, %v2018
    %v2146 = vadd.f32 %v2145, %v2019
    %v2147 = vadd.f32 %v2146, %v2020
    %v2148 = vadd.f32 %v2147, %v2021
    %v2149 = vadd.f32 %v2148, %v2022
    %v2150 = vadd.f32 %v2149, %v2023
    %v2151 = vadd.f32 %v2150, %v2024
    %v2152 = vadd.f32 %v2151, %v2025
    %v2153 = vadd.f32 %v2152, %v2026
    %v2154 = vadd.f32 %v2153, %v2027
    %v2155 = vadd.f32 %v2154, %v2028
    %v2156 = vadd.f32 %v2155, %v2029
    %v2157 = vadd.f32 %v2156, %v2030
    %v2158 = vadd.f32 %v2157, %v2031
    %v2159 = vadd.f32 %v2158, %v2032
    %v2160 = vadd.f32 %v2159, %v2033
    %v2161 = vadd.f32 %v2160, %v2034
    %v2162 = vadd.f32 %v2161, %v2035
    %v2163 = vadd.f32 %v2162, %v2036
    %v2164 = vadd.f32 %v2163, %v2037
    %v2165 = vadd.f32 %v2164, %v2038
    %v2166 = vadd.f32 %v2165, %v2039
    %v2167 = vadd.f32 %v2166, %v2040
    %v2168 = vadd.f32 %v2167, %v2041
    %v2169 = vadd.f32 %v2168, %v2042
    %v2170 = vadd.f32 %v2169, %v2043
    %v2171 = vadd.f32 %v2170, %v2044
    %v2172 = vadd.f32 %v2171, %v2045
    %v2173 = vadd.f32 %v2172, %v2046
    %v2174 = vadd.f32 %v2173, %v2047
    %v2175 = vadd.f32 %v2174, %v2048
    %v2176 = vadd.f32 %v2175, %v2049
    %v2177 = vadd.f32 %v2176, %v2050
    %v2178 = vadd.f32 %v2177, %v2051
    %v2179 = vadd.f32 %v2178, %v2052
    %v2180 = vadd.f32 %v2179, %v2053
    %v2181 = vadd.f32 %v2180, %v2054
    %v2182 = vadd.f32 %v2181, %v2055
    %v2183 = vadd.f32 %v2182, %v2056
    %v2184 = vadd.f32 %v2183, %v2057
    %v2185 = vadd.f32 %v2184, %v2058
    %v2186 = vadd.f32 %v2185, %v2059
    %v2187 = vadd.f32 %v2186, %v2060
    %v2188 = vadd.f32 %v2187, %v2061
    %v2189 = vadd.f32 %v2188, %v2062
    %v2190 = vadd.f32 %v2189, %v2063
    %v2191 = vadd.f32 %v2190, %v2064
    %v2192 = vadd.f32 %v2191, %v2065
    %v2193 = vadd.f32 %v2192, %v2066
    %v2194 = vadd.f32 %v2193, %v2067
    %v2195 = vrot.slane %v2194, 4
    %v2196 = vadd.f32 %v2194, %v2195
    %v2197 = vrot.slane %v2196, 2
    %v2198 = vadd.f32 %v2196, %v2197
    %v2199 = vrot.slane %v2198, 1
    %v2200 = vadd.f32 %v2198, %v2199
    %2201 = vst [vmem:[#allocation10] sm:$0x1] %v2200
    // Predicated region
    $region18: #{tpu_custom_call.1} parent=1 // pred_check
      _
    $region19: #{tpu_custom_call.1} parent=1 // pred_check_branch
      %2203 = sbr.rel (0) target = $region21
    $region20: #{tpu_custom_call.1} parent=1 // pred_region
      %s2205 = ssub.s32 8192, 8192
      %2206 = vsyncadd [#allocation4], %s2205
      %s2207 = sshll.u32 [#allocation7], 4
      %s2208 = int_to_ptr.vmem [resolvable:$true] %s2207
      %2213 = dma.vmem_to_hbm [thread:$0]  %s2208, 8192, %s2, [#allocation4], 64, 64, 4
    $region21: #{tpu_custom_call.1} parent=1 // pred_fallthru
      _
    // Predicated region
    $region22: #{tpu_custom_call.1} parent=1 // pred_check
      _
    $region23: #{tpu_custom_call.1} parent=1 // pred_check_branch
      %2215 = sbr.rel (0) target = $region25
    $region24: #{tpu_custom_call.1} parent=1 // pred_region
      %s2217 = ssub.s32 16, 16
      %2218 = vsyncadd [#allocation9], %s2217
      %s2220 = sshll.u32 [#allocation8], 4
      %s2221 = int_to_ptr.vmem [resolvable:$true] %s2220
      %2223 = dma.vmem_to_hbm [thread:$0]  %s2221, 16, %s3, [#allocation9]
    $region25: #{tpu_custom_call.1} parent=1 // pred_fallthru
      _
    // Predicated region
    $region26: #{tpu_custom_call.1} parent=1 // pred_check
      _
    $region27: #{tpu_custom_call.1} parent=1 // pred_check_branch
      %2225 = sbr.rel (0) target = $region29
    $region28: #{tpu_custom_call.1} parent=1 // pred_region
      %s2227 = ssub.s32 16, 16
      %2228 = vsyncadd [#allocation9], %s2227
      %s2230 = sshll.u32 [#allocation10], 4
      %s2231 = int_to_ptr.vmem [resolvable:$true] %s2230
      %2233 = dma.vmem_to_hbm [thread:$0]  %s2231, 16, %s4, [#allocation9]
    $region29: #{tpu_custom_call.1} parent=1 // pred_fallthru
      _
    // Predicated region
    $region30: #{tpu_custom_call.1} parent=1 // pred_check
      _
    $region31: #{tpu_custom_call.1} parent=1 // pred_check_branch
      %2235 = sbr.rel (0) target = $region33
    $region32: #{tpu_custom_call.1} parent=1 // pred_region
      %2236 = dma.done [#allocation4], 8192
    $region33: #{tpu_custom_call.1} parent=1 // pred_fallthru
      _
    // Predicated region
    $region34: #{tpu_custom_call.1} parent=1 // pred_check
      _
    $region35: #{tpu_custom_call.1} parent=1 // pred_check_branch
      %2238 = sbr.rel (0) target = $region37
    $region36: #{tpu_custom_call.1} parent=1 // pred_region
      %2239 = dma.done [#allocation9], 16
    $region37: #{tpu_custom_call.1} parent=1 // pred_fallthru
      _
    // Predicated region
    $region38: #{tpu_custom_call.1} parent=1 // pred_check
      _
    $region39: #{tpu_custom_call.1} parent=1 // pred_check_branch
      %2241 = sbr.rel (0) target = $region41
    $region40: #{tpu_custom_call.1} parent=1 // pred_region
      %2242 = dma.done [#allocation9], 16
    $region41: #{tpu_custom_call.1} parent=1 // pred_fallthru
      _
    %2243 = vsyncpa [#allocation3], 1
    %2244 = vsyncpa [#allocation6], 1
    %2245 = vsyncpa [#allocation4], 1
    %2246 = vsyncpa [#allocation9], 1

</llo_original>
